<compile_context>
chip_gen: v7x
topology: tpu7x:2x2x1
jax: 0.10.0
libtpu: 0.0.40
codegen_flags: <defaults>
</compile_context>

<pallas_src>
import functools

import jax
import jax.numpy as jnp
import numpy as np
from jax.experimental import pallas as pl
from jax.experimental.pallas import tpu as pltpu

RATIO = 8
KSIZE = 7
PAD = 3          # padding for kernel_size = 7
TB_MAX = 8       # images per grid step (keeps the packed conv weight tiny)


def _round_up(n, m):
    return (n + m - 1) // m * m


def _choose_tb(B, C, HW, max_bytes=4 << 20):
    """Largest divisor of B that keeps grid >= 2 (v7x megacore), <= TB_MAX, and
    whose (TB*C, HW) f32 block stays far under the scoped-VMEM limit."""
    limit = min(TB_MAX, max(1, B // 2))
    best = 1
    for tb in range(1, limit + 1):
        if B % tb == 0 and tb * C * HW * 4 <= max_bytes:
            best = tb
    return best


def cbam_kernel(x_ref, w1t_ref, w2_ref, wbig_ref, o_ref, s_ref, *, TB, C, W, SR):
    # x_ref   : (TB*C, HW) f32 VMEM  (TB images, channel-major, flattened HxW)
    # w1t_ref : (C, Ch)    f32 VMEM  (fc1 weight, transposed: w_fc1.T)
    # w2_ref  : (C, Ch)    f32 VMEM  (fc2 weight)
    # wbig_ref: (QR, SR)   f32 VMEM  (packed 7x7 conv weights, block layout)
    # o_ref   : (TB*C, HW) f32 VMEM
    # s_ref   : (SR, HW)   f32 VMEM scratch (shifted & masked pooled maps)
    x = x_ref[...]
    HW = x.shape[1]

    # ---------------- Channel attention ----------------
    # Avg / max pool over all spatial positions, once for the whole block.
    avg_all = jnp.sum(x, axis=1, keepdims=True) * (1.0 / HW)   # (TB*C, 1)
    max_all = jnp.max(x, axis=1, keepdims=True)                # (TB*C, 1)
    w1t = w1t_ref[...]   # (C, Ch)
    w2 = w2_ref[...]     # (C, Ch)

    base = PAD * 2 * TB  # scratch-row offset of the unshifted (dj == PAD) chunk
    ys = []
    for b in range(TB):  # unrolled; all slices below are static & tile aligned
        a = avg_all[b * C:(b + 1) * C, :]                      # (C, 1)
        m = max_all[b * C:(b + 1) * C, :]                      # (C, 1)
        # fc1 (1x1 conv) as a sublane reduction; fc2 applied once to the sum
        # of the two ReLU'd hidden vectors (fc2 is linear, no bias).
        h = (jnp.maximum(jnp.sum(w1t * a, axis=0, keepdims=True), 0.0)
             + jnp.maximum(jnp.sum(w1t * m, axis=0, keepdims=True), 0.0))  # (1, Ch)
        logits = jnp.sum(w2 * h, axis=1, keepdims=True)        # (C, 1)
        ca = jax.nn.sigmoid(logits)                            # (C, 1)
        yb = x[b * C:(b + 1) * C, :] * ca                      # (C, HW)
        ys.append(yb)
        # ------ spatial pooling over channels, packed into the scratch ------
        # Row layout of s_ref: r = dj*(2*TB) + c*TB + b   (c: 0 = avg, 1 = max)
        s_ref[pl.ds(base + b, 1), :] = jnp.mean(yb, axis=0, keepdims=True)
        s_ref[pl.ds(base + TB + b, 1), :] = jnp.max(yb, axis=0, keepdims=True)

    # ---------------- Spatial attention: packed 7x7 conv ----------------
    kpos = jax.lax.broadcasted_iota(jnp.int32, (1, HW), 1)     # flat index k
    col = kpos % W                                             # column  k % W

    # Lane (W-direction) shifts: ONE roll + mask per offset for every image
    # and both pooled channels at once (6 rolls total per grid step).
    sbase = s_ref[pl.ds(base, 2 * TB), :]                      # (2*TB, HW)
    for dj in range(KSIZE):
        if dj == PAD:
            continue
        off = dj - PAD                                         # source col = col + off
        rolled = pltpu.roll(sbase, shift=(-off) % HW, axis=1)
        maskf = jnp.where((col + off >= 0) & (col + off < W), 1.0, 0.0)
        s_ref[pl.ds(dj * 2 * TB, 2 * TB), :] = rolled * maskf
    if SR > KSIZE * 2 * TB:  # zero the sublane-padding rows (Wbig cols are 0 there)
        s_ref[pl.ds(KSIZE * 2 * TB, SR - KSIZE * 2 * TB), :] = (
            jnp.zeros((SR - KSIZE * 2 * TB, HW), jnp.float32))

    # All 7 row-offset weighted sums, for all images, in one MXU matmul:
    #   q[di*TB + b, :] = sum_{c,dj} w_spatial[c,di,dj] * s[dj*2*TB + c*TB + b, :]
    q = jnp.dot(wbig_ref[...], s_ref[...],
                preferred_element_type=jnp.float32)            # (QR, HW)

    # Row (H-direction) shifts: one roll + mask per offset for all images.
    acc = q[PAD * TB:(PAD + 1) * TB, :]                        # (TB, HW), di == PAD
    for di in range(KSIZE):
        if di == PAD:
            continue
        offr = (di - PAD) * W                                  # source row = row + (di-PAD)
        rolled = pltpu.roll(q[di * TB:(di + 1) * TB, :], shift=(-offr) % HW, axis=1)
        maskf = jnp.where((kpos + offr >= 0) & (kpos + offr < HW), 1.0, 0.0)
        acc = acc + rolled * maskf
    sa = jax.nn.sigmoid(acc)                                   # (TB, HW)

    for b in range(TB):
        o_ref[pl.ds(b * C, C), :] = ys[b] * sa[b:b + 1, :]     # lane-dense stores


def cbam_block(x, w_fc1, w_fc2, w_spatial):
    """x: (B, C, H, W) f32, w_fc1: (Ch, C), w_fc2: (C, Ch), w_spatial: (2, 7, 7)."""
    B, C, H, W = x.shape
    Ch = w_fc1.shape[0]
    HW = H * W
    # TODO(synk): pad C to a multiple of 8 / H*W to a multiple of 128 for shapes
    # that don't already satisfy the TPU (8, 128) tiling; not needed here.
    if C % 8 != 0 or HW % 128 != 0:
        raise NotImplementedError("cbam_block kernel expects C % 8 == 0 and H*W % 128 == 0")

    TB = _choose_tb(B, C, HW)              # images per grid step
    G = B // TB
    SR = _round_up(2 * KSIZE * TB, 8)      # rows of the packed shifted-map scratch
    QR = _round_up(KSIZE * TB, 8)          # rows of the packed conv output

    xf = x.astype(jnp.float32).reshape(B * C, HW)              # free contiguous reshape
    w1t = jnp.asarray(w_fc1, jnp.float32).T                    # (C, Ch)
    w2 = jnp.asarray(w_fc2, jnp.float32)                       # (C, Ch)

    # Packed 7x7 conv weight (block layout matching the kernel's scratch rows):
    #   wbig[di*TB + b, dj*2*TB + c*TB + b] = w_spatial[c, di, dj]
    w_sp = jnp.asarray(w_spatial, jnp.float32)
    di_i, b_i, c_i, dj_i = np.meshgrid(np.arange(KSIZE), np.arange(TB),
                                       np.arange(2), np.arange(KSIZE), indexing="ij")
    rows = (di_i * TB + b_i).ravel()
    cols = (dj_i * 2 * TB + c_i * TB + b_i).ravel()
    vals = w_sp[c_i.ravel(), di_i.ravel(), dj_i.ravel()]
    wbig = jnp.zeros((QR, SR), jnp.float32).at[rows, cols].set(vals)

    kernel = functools.partial(cbam_kernel, TB=TB, C=C, W=W, SR=SR)

    out = pl.pallas_call(
        kernel,
        out_shape=jax.ShapeDtypeStruct((B * C, HW), jnp.float32),
        grid_spec=pltpu.PrefetchScalarGridSpec(
            num_scalar_prefetch=0,
            grid=(G,),
            in_specs=[
                pl.BlockSpec((TB * C, HW), lambda g: (g, 0)),
                pl.BlockSpec((C, Ch), lambda g: (0, 0)),
                pl.BlockSpec((C, Ch), lambda g: (0, 0)),
                pl.BlockSpec((QR, SR), lambda g: (0, 0)),
            ],
            out_specs=pl.BlockSpec((TB * C, HW), lambda g: (g, 0)),
            scratch_shapes=[pltpu.VMEM((SR, HW), jnp.float32)],
        ),
        compiler_params=pltpu.CompilerParams(
            dimension_semantics=("parallel",)   # independent image groups
        ),
    )(xf, w1t, w2, wbig)

    return out.reshape(B, C, H, W)


def cbam_ref(x, w_fc1, w_fc2, w_spatial):
    """Pure-JAX reference matching the PyTorch forward (full f32 precision)."""
    hp = jax.lax.Precision.HIGHEST
    avg = jnp.mean(x, axis=(2, 3))  # (B, C)
    mx = jnp.max(x, axis=(2, 3))    # (B, C)

    def mlp(v):
        h = jnp.maximum(jnp.matmul(v, w_fc1.T, precision=hp), 0.0)
        return jnp.matmul(h, w_fc2.T, precision=hp)

    ca = jax.nn.sigmoid(mlp(avg) + mlp(mx))  # (B, C)
    y = x * ca[:, :, None, None]

    avg_c = jnp.mean(y, axis=1, keepdims=True)
    max_c = jnp.max(y, axis=1, keepdims=True)
    s = jnp.concatenate([avg_c, max_c], axis=1)  # (B, 2, H, W)
    conv = jax.lax.conv_general_dilated(
        s,
        w_spatial[None],  # (1, 2, 7, 7) OIHW
        window_strides=(1, 1),
        padding=[(PAD, PAD), (PAD, PAD)],
        dimension_numbers=("NCHW", "OIHW", "NCHW"),
        precision=hp,
    )
    sa = jax.nn.sigmoid(conv)
    return y * sa


if __name__ == "__main__":
    B, C, H, W = 4, 16, 16, 16          # channel=16, ratio=8 -> hidden=2
    Ch = C // RATIO

    key = jax.random.PRNGKey(0)
    k1, k2, k3, k4 = jax.random.split(key, 4)
    x = jax.random.normal(k1, (B, C, H, W), jnp.float32)
    # Deterministic synthetic weights (no checkpoint loading).
    w_fc1 = jax.random.normal(k2, (Ch, C), jnp.float32) * 0.3      # Conv2d(C, C//8, 1), no bias
    w_fc2 = jax.random.normal(k3, (C, Ch), jnp.float32) * 0.3      # Conv2d(C//8, C, 1), no bias
    w_spatial = jax.random.normal(k4, (2, KSIZE, KSIZE), jnp.float32) * 0.1  # Conv2d(2,1,7), no bias

    out = jax.jit(cbam_block)(x, w_fc1, w_fc2, w_spatial)
    out = jax.block_until_ready(out)

    ref = cbam_ref(x, w_fc1, w_fc2, w_spatial)
    assert out.shape == ref.shape == (B, C, H, W)
    np.testing.assert_allclose(np.asarray(out), np.asarray(ref), rtol=5e-3, atol=5e-3)

    print("KERNEL_OK")
</pallas_src>

<mosaic_0001>
module attributes {stable_mosaic.version = 11 : i64} {
  func.func @cbam_kernel(%arg0: i32, %arg1: memref<32x256xf32, #tpu.memory_space<vmem>>, %arg2: memref<16x2xf32, #tpu.memory_space<vmem>>, %arg3: memref<16x2xf32, #tpu.memory_space<vmem>>, %arg4: memref<16x32xf32, #tpu.memory_space<vmem>>, %arg5: memref<32x256xf32, #tpu.memory_space<vmem>>, %arg6: memref<32x256xf32, #tpu.memory_space<vmem>>) attributes {dimension_semantics = [#tpu.dimension_semantics<parallel>], iteration_bounds = array<i64: 2>, scalar_prefetch = 0 : i64, scratch_operands = 1 : i64, tpu.core_type = #tpu.core_type<tc>, window_params = [{transform_indices = @transform_0, window_bounds = array<i64: 32, 256>}, {pipeline_mode = #tpu.pipeline_mode<synchronous>, transform_indices = @transform_1, window_bounds = array<i64: 16, 2>}, {pipeline_mode = #tpu.pipeline_mode<synchronous>, transform_indices = @transform_2, window_bounds = array<i64: 16, 2>}, {pipeline_mode = #tpu.pipeline_mode<synchronous>, transform_indices = @transform_3, window_bounds = array<i64: 16, 32>}, {transform_indices = @transform_4, window_bounds = array<i64: 32, 256>}]} {
    %c0 = arith.constant 0 : index
    %c0_0 = arith.constant 0 : index
    %0 = vector.load %arg1[%c0, %c0_0] : memref<32x256xf32, #tpu.memory_space<vmem>>, vector<32x256xf32>
    %cst = arith.constant dense<0.000000e+00> : vector<32xf32>
    %1 = vector.multi_reduction <add>, %0, %cst [1] : vector<32x256xf32> to vector<32xf32>
    %2 = vector.shape_cast %1 : vector<32xf32> to vector<32x1xf32>
    %cst_1 = arith.constant 3.906250e-03 : f32
    %3 = vector.broadcast %cst_1 : f32 to vector<32x1xf32>
    %4 = arith.mulf %2, %3 : vector<32x1xf32>
    %cst_2 = arith.constant dense<0xFF800000> : vector<32xf32>
    %5 = vector.multi_reduction <maximumf>, %0, %cst_2 [1] : vector<32x256xf32> to vector<32xf32>
    %6 = vector.shape_cast %5 : vector<32xf32> to vector<32x1xf32>
    %c0_3 = arith.constant 0 : index
    %c0_4 = arith.constant 0 : index
    %7 = vector.load %arg2[%c0_3, %c0_4] : memref<16x2xf32, #tpu.memory_space<vmem>>, vector<16x2xf32>
    %c0_5 = arith.constant 0 : index
    %c0_6 = arith.constant 0 : index
    %8 = vector.load %arg3[%c0_5, %c0_6] : memref<16x2xf32, #tpu.memory_space<vmem>>, vector<16x2xf32>
    %9 = vector.extract_strided_slice %4 {offsets = [0, 0], sizes = [16, 1], strides = [1, 1]} : vector<32x1xf32> to vector<16x1xf32>
    %10 = vector.extract_strided_slice %6 {offsets = [0, 0], sizes = [16, 1], strides = [1, 1]} : vector<32x1xf32> to vector<16x1xf32>
    %11 = vector.broadcast %9 : vector<16x1xf32> to vector<16x2xf32>
    %12 = arith.mulf %7, %11 : vector<16x2xf32>
    %cst_7 = arith.constant dense<0.000000e+00> : vector<2xf32>
    %13 = vector.multi_reduction <add>, %12, %cst_7 [0] : vector<16x2xf32> to vector<2xf32>
    %14 = vector.shape_cast %13 : vector<2xf32> to vector<1x2xf32>
    %cst_8 = arith.constant 0.000000e+00 : f32
    %15 = vector.broadcast %cst_8 : f32 to vector<1x2xf32>
    %16 = arith.maximumf %14, %15 : vector<1x2xf32>
    %17 = vector.broadcast %10 : vector<16x1xf32> to vector<16x2xf32>
    %18 = arith.mulf %7, %17 : vector<16x2xf32>
    %cst_9 = arith.constant dense<0.000000e+00> : vector<2xf32>
    %19 = vector.multi_reduction <add>, %18, %cst_9 [0] : vector<16x2xf32> to vector<2xf32>
    %20 = vector.shape_cast %19 : vector<2xf32> to vector<1x2xf32>
    %cst_10 = arith.constant 0.000000e+00 : f32
    %21 = vector.broadcast %cst_10 : f32 to vector<1x2xf32>
    %22 = arith.maximumf %20, %21 : vector<1x2xf32>
    %23 = arith.addf %16, %22 : vector<1x2xf32>
    %24 = vector.broadcast %23 : vector<1x2xf32> to vector<16x2xf32>
    %25 = arith.mulf %8, %24 : vector<16x2xf32>
    %cst_11 = arith.constant dense<0.000000e+00> : vector<16xf32>
    %26 = vector.multi_reduction <add>, %25, %cst_11 [1] : vector<16x2xf32> to vector<16xf32>
    %27 = vector.shape_cast %26 : vector<16xf32> to vector<16x1xf32>
    %28 = arith.negf %27 : vector<16x1xf32>
    %29 = math.exp %28 : vector<16x1xf32>
    %cst_12 = arith.constant 1.000000e+00 : f32
    %30 = vector.broadcast %cst_12 : f32 to vector<16x1xf32>
    %31 = arith.addf %30, %29 : vector<16x1xf32>
    %32 = arith.divf %30, %31 : vector<16x1xf32>
    %33 = vector.extract_strided_slice %0 {offsets = [0, 0], sizes = [16, 256], strides = [1, 1]} : vector<32x256xf32> to vector<16x256xf32>
    %34 = vector.broadcast %32 : vector<16x1xf32> to vector<16x256xf32>
    %35 = arith.mulf %33, %34 : vector<16x256xf32>
    %cst_13 = arith.constant dense<0.000000e+00> : vector<256xf32>
    %36 = vector.multi_reduction <add>, %35, %cst_13 [0] : vector<16x256xf32> to vector<256xf32>
    %37 = vector.shape_cast %36 : vector<256xf32> to vector<1x256xf32>
    %cst_14 = arith.constant 1.600000e+01 : f32
    %38 = vector.broadcast %cst_14 : f32 to vector<1x256xf32>
    %39 = arith.divf %37, %38 : vector<1x256xf32>
    %c12 = arith.constant 12 : index
    %c0_15 = arith.constant 0 : index
    %40 = vector.load %arg6[%c12, %c0_15] : memref<32x256xf32, #tpu.memory_space<vmem>>, vector<1x256xf32>
    tpu.vector_store %arg6[%c12, %c0_15], %39 {strides = array<i32>} : memref<32x256xf32, #tpu.memory_space<vmem>>, vector<1x256xf32>,
    %cst_16 = arith.constant dense<0xFF800000> : vector<256xf32>
    %41 = vector.multi_reduction <maximumf>, %35, %cst_16 [0] : vector<16x256xf32> to vector<256xf32>
    %42 = vector.shape_cast %41 : vector<256xf32> to vector<1x256xf32>
    %c14 = arith.constant 14 : index
    %c0_17 = arith.constant 0 : index
    %43 = vector.load %arg6[%c14, %c0_17] : memref<32x256xf32, #tpu.memory_space<vmem>>, vector<1x256xf32>
    tpu.vector_store %arg6[%c14, %c0_17], %42 {strides = array<i32>} : memref<32x256xf32, #tpu.memory_space<vmem>>, vector<1x256xf32>,
    %44 = vector.extract_strided_slice %4 {offsets = [16, 0], sizes = [16, 1], strides = [1, 1]} : vector<32x1xf32> to vector<16x1xf32>
    %45 = vector.extract_strided_slice %6 {offsets = [16, 0], sizes = [16, 1], strides = [1, 1]} : vector<32x1xf32> to vector<16x1xf32>
    %46 = vector.broadcast %44 : vector<16x1xf32> to vector<16x2xf32>
    %47 = arith.mulf %7, %46 : vector<16x2xf32>
    %cst_18 = arith.constant dense<0.000000e+00> : vector<2xf32>
    %48 = vector.multi_reduction <add>, %47, %cst_18 [0] : vector<16x2xf32> to vector<2xf32>
    %49 = vector.shape_cast %48 : vector<2xf32> to vector<1x2xf32>
    %cst_19 = arith.constant 0.000000e+00 : f32
    %50 = vector.broadcast %cst_19 : f32 to vector<1x2xf32>
    %51 = arith.maximumf %49, %50 : vector<1x2xf32>
    %52 = vector.broadcast %45 : vector<16x1xf32> to vector<16x2xf32>
    %53 = arith.mulf %7, %52 : vector<16x2xf32>
    %cst_20 = arith.constant dense<0.000000e+00> : vector<2xf32>
    %54 = vector.multi_reduction <add>, %53, %cst_20 [0] : vector<16x2xf32> to vector<2xf32>
    %55 = vector.shape_cast %54 : vector<2xf32> to vector<1x2xf32>
    %cst_21 = arith.constant 0.000000e+00 : f32
    %56 = vector.broadcast %cst_21 : f32 to vector<1x2xf32>
    %57 = arith.maximumf %55, %56 : vector<1x2xf32>
    %58 = arith.addf %51, %57 : vector<1x2xf32>
    %59 = vector.broadcast %58 : vector<1x2xf32> to vector<16x2xf32>
    %60 = arith.mulf %8, %59 : vector<16x2xf32>
    %cst_22 = arith.constant dense<0.000000e+00> : vector<16xf32>
    %61 = vector.multi_reduction <add>, %60, %cst_22 [1] : vector<16x2xf32> to vector<16xf32>
    %62 = vector.shape_cast %61 : vector<16xf32> to vector<16x1xf32>
    %63 = arith.negf %62 : vector<16x1xf32>
    %64 = math.exp %63 : vector<16x1xf32>
    %cst_23 = arith.constant 1.000000e+00 : f32
    %65 = vector.broadcast %cst_23 : f32 to vector<16x1xf32>
    %66 = arith.addf %65, %64 : vector<16x1xf32>
    %67 = arith.divf %65, %66 : vector<16x1xf32>
    %68 = vector.extract_strided_slice %0 {offsets = [16, 0], sizes = [16, 256], strides = [1, 1]} : vector<32x256xf32> to vector<16x256xf32>
    %69 = vector.broadcast %67 : vector<16x1xf32> to vector<16x256xf32>
    %70 = arith.mulf %68, %69 : vector<16x256xf32>
    %cst_24 = arith.constant dense<0.000000e+00> : vector<256xf32>
    %71 = vector.multi_reduction <add>, %70, %cst_24 [0] : vector<16x256xf32> to vector<256xf32>
    %72 = vector.shape_cast %71 : vector<256xf32> to vector<1x256xf32>
    %cst_25 = arith.constant 1.600000e+01 : f32
    %73 = vector.broadcast %cst_25 : f32 to vector<1x256xf32>
    %74 = arith.divf %72, %73 : vector<1x256xf32>
    %c13 = arith.constant 13 : index
    %c0_26 = arith.constant 0 : index
    %75 = vector.load %arg6[%c13, %c0_26] : memref<32x256xf32, #tpu.memory_space<vmem>>, vector<1x256xf32>
    tpu.vector_store %arg6[%c13, %c0_26], %74 {strides = array<i32>} : memref<32x256xf32, #tpu.memory_space<vmem>>, vector<1x256xf32>,
    %cst_27 = arith.constant dense<0xFF800000> : vector<256xf32>
    %76 = vector.multi_reduction <maximumf>, %70, %cst_27 [0] : vector<16x256xf32> to vector<256xf32>
    %77 = vector.shape_cast %76 : vector<256xf32> to vector<1x256xf32>
    %c15 = arith.constant 15 : index
    %c0_28 = arith.constant 0 : index
    %78 = vector.load %arg6[%c15, %c0_28] : memref<32x256xf32, #tpu.memory_space<vmem>>, vector<1x256xf32>
    tpu.vector_store %arg6[%c15, %c0_28], %77 {strides = array<i32>} : memref<32x256xf32, #tpu.memory_space<vmem>>, vector<1x256xf32>,
    %79 = tpu.iota {dimensions = array<i32: 1>} : vector<1x256xi32>
    %c16_i32 = arith.constant 16 : i32
    %c0_i32 = arith.constant 0 : i32
    %80 = arith.cmpi eq, %c16_i32, %c0_i32 : i32
    %c1_i32 = arith.constant 1 : i32
    %81 = arith.select %80, %c1_i32, %c16_i32 : i32
    %82 = vector.broadcast %81 : i32 to vector<1x256xi32>
    %83 = arith.remsi %79, %82 : vector<1x256xi32>
    %c0_i32_29 = arith.constant 0 : i32
    %84 = vector.broadcast %c0_i32_29 : i32 to vector<1x256xi32>
    %85 = arith.cmpi ne, %83, %84 : vector<1x256xi32>
    %c0_i32_30 = arith.constant 0 : i32
    %86 = vector.broadcast %c0_i32_30 : i32 to vector<1x256xi32>
    %87 = arith.cmpi slt, %83, %86 : vector<1x256xi32>
    %c0_i32_31 = arith.constant 0 : i32
    %88 = arith.cmpi slt, %81, %c0_i32_31 : i32
    %89 = vector.broadcast %88 : i1 to vector<1x256xi1>
    %90 = vector.broadcast %89 : vector<1x256xi1> to vector<1x256xi1>
    %91 = arith.xori %87, %90 : vector<1x256xi1>
    %92 = arith.andi %91, %85 : vector<1x256xi1>
    %93 = vector.broadcast %81 : i32 to vector<1x256xi32>
    %94 = arith.addi %83, %93 : vector<1x256xi32>
    %95 = arith.select %92, %94, %83 : vector<1x256xi1>, vector<1x256xi32>
    %c12_32 = arith.constant 12 : index
    %c0_33 = arith.constant 0 : index
    %96 = vector.load %arg6[%c12_32, %c0_33] : memref<32x256xf32, #tpu.memory_space<vmem>>, vector<4x256xf32>
    %c3_i32 = arith.constant 3 : i32
    %97 = tpu.dynamic_rotate %96 by %c3_i32 dim 1 : vector<4x256xf32>, i32 -> vector<4x256xf32>
    %c-3_i32 = arith.constant -3 : i32
    %98 = vector.broadcast %c-3_i32 : i32 to vector<1x256xi32>
    %99 = arith.addi %95, %98 : vector<1x256xi32>
    %c0_i32_34 = arith.constant 0 : i32
    %100 = vector.broadcast %c0_i32_34 : i32 to vector<1x256xi32>
    %101 = arith.cmpi sge, %99, %100 : vector<1x256xi32>
    %c-3_i32_35 = arith.constant -3 : i32
    %102 = vector.broadcast %c-3_i32_35 : i32 to vector<1x256xi32>
    %103 = arith.addi %95, %102 : vector<1x256xi32>
    %c16_i32_36 = arith.constant 16 : i32
    %104 = vector.broadcast %c16_i32_36 : i32 to vector<1x256xi32>
    %105 = arith.cmpi slt, %103, %104 : vector<1x256xi32>
    %106 = arith.andi %101, %105 : vector<1x256xi1>
    %cst_37 = arith.constant 1.000000e+00 : f32
    %cst_38 = arith.constant 0.000000e+00 : f32
    %107 = vector.broadcast %cst_37 : f32 to vector<1x256xf32>
    %108 = vector.broadcast %cst_38 : f32 to vector<1x256xf32>
    %109 = arith.select %106, %107, %108 : vector<1x256xi1>, vector<1x256xf32>
    %110 = vector.broadcast %109 : vector<1x256xf32> to vector<4x256xf32>
    %111 = arith.mulf %97, %110 : vector<4x256xf32>
    %c0_39 = arith.constant 0 : index
    %c0_40 = arith.constant 0 : index
    %112 = vector.load %arg6[%c0_39, %c0_40] : memref<32x256xf32, #tpu.memory_space<vmem>>, vector<4x256xf32>
    tpu.vector_store %arg6[%c0_39, %c0_40], %111 {strides = array<i32>} : memref<32x256xf32, #tpu.memory_space<vmem>>, vector<4x256xf32>,
    %c2_i32 = arith.constant 2 : i32
    %113 = tpu.dynamic_rotate %96 by %c2_i32 dim 1 : vector<4x256xf32>, i32 -> vector<4x256xf32>
    %c-2_i32 = arith.constant -2 : i32
    %114 = vector.broadcast %c-2_i32 : i32 to vector<1x256xi32>
    %115 = arith.addi %95, %114 : vector<1x256xi32>
    %c0_i32_41 = arith.constant 0 : i32
    %116 = vector.broadcast %c0_i32_41 : i32 to vector<1x256xi32>
    %117 = arith.cmpi sge, %115, %116 : vector<1x256xi32>
    %c-2_i32_42 = arith.constant -2 : i32
    %118 = vector.broadcast %c-2_i32_42 : i32 to vector<1x256xi32>
    %119 = arith.addi %95, %118 : vector<1x256xi32>
    %c16_i32_43 = arith.constant 16 : i32
    %120 = vector.broadcast %c16_i32_43 : i32 to vector<1x256xi32>
    %121 = arith.cmpi slt, %119, %120 : vector<1x256xi32>
    %122 = arith.andi %117, %121 : vector<1x256xi1>
    %cst_44 = arith.constant 1.000000e+00 : f32
    %cst_45 = arith.constant 0.000000e+00 : f32
    %123 = vector.broadcast %cst_44 : f32 to vector<1x256xf32>
    %124 = vector.broadcast %cst_45 : f32 to vector<1x256xf32>
    %125 = arith.select %122, %123, %124 : vector<1x256xi1>, vector<1x256xf32>
    %126 = vector.broadcast %125 : vector<1x256xf32> to vector<4x256xf32>
    %127 = arith.mulf %113, %126 : vector<4x256xf32>
    %c4 = arith.constant 4 : index
    %c0_46 = arith.constant 0 : index
    %128 = vector.load %arg6[%c4, %c0_46] : memref<32x256xf32, #tpu.memory_space<vmem>>, vector<4x256xf32>
    tpu.vector_store %arg6[%c4, %c0_46], %127 {strides = array<i32>} : memref<32x256xf32, #tpu.memory_space<vmem>>, vector<4x256xf32>,
    %c1_i32_47 = arith.constant 1 : i32
    %129 = tpu.dynamic_rotate %96 by %c1_i32_47 dim 1 : vector<4x256xf32>, i32 -> vector<4x256xf32>
    %c-1_i32 = arith.constant -1 : i32
    %130 = vector.broadcast %c-1_i32 : i32 to vector<1x256xi32>
    %131 = arith.addi %95, %130 : vector<1x256xi32>
    %c0_i32_48 = arith.constant 0 : i32
    %132 = vector.broadcast %c0_i32_48 : i32 to vector<1x256xi32>
    %133 = arith.cmpi sge, %131, %132 : vector<1x256xi32>
    %c-1_i32_49 = arith.constant -1 : i32
    %134 = vector.broadcast %c-1_i32_49 : i32 to vector<1x256xi32>
    %135 = arith.addi %95, %134 : vector<1x256xi32>
    %c16_i32_50 = arith.constant 16 : i32
    %136 = vector.broadcast %c16_i32_50 : i32 to vector<1x256xi32>
    %137 = arith.cmpi slt, %135, %136 : vector<1x256xi32>
    %138 = arith.andi %133, %137 : vector<1x256xi1>
    %cst_51 = arith.constant 1.000000e+00 : f32
    %cst_52 = arith.constant 0.000000e+00 : f32
    %139 = vector.broadcast %cst_51 : f32 to vector<1x256xf32>
    %140 = vector.broadcast %cst_52 : f32 to vector<1x256xf32>
    %141 = arith.select %138, %139, %140 : vector<1x256xi1>, vector<1x256xf32>
    %142 = vector.broadcast %141 : vector<1x256xf32> to vector<4x256xf32>
    %143 = arith.mulf %129, %142 : vector<4x256xf32>
    %c8 = arith.constant 8 : index
    %c0_53 = arith.constant 0 : index
    %144 = vector.load %arg6[%c8, %c0_53] : memref<32x256xf32, #tpu.memory_space<vmem>>, vector<4x256xf32>
    tpu.vector_store %arg6[%c8, %c0_53], %143 {strides = array<i32>} : memref<32x256xf32, #tpu.memory_space<vmem>>, vector<4x256xf32>,
    %c255_i32 = arith.constant 255 : i32
    %145 = tpu.dynamic_rotate %96 by %c255_i32 dim 1 : vector<4x256xf32>, i32 -> vector<4x256xf32>
    %c1_i32_54 = arith.constant 1 : i32
    %146 = vector.broadcast %c1_i32_54 : i32 to vector<1x256xi32>
    %147 = arith.addi %95, %146 : vector<1x256xi32>
    %c0_i32_55 = arith.constant 0 : i32
    %148 = vector.broadcast %c0_i32_55 : i32 to vector<1x256xi32>
    %149 = arith.cmpi sge, %147, %148 : vector<1x256xi32>
    %c1_i32_56 = arith.constant 1 : i32
    %150 = vector.broadcast %c1_i32_56 : i32 to vector<1x256xi32>
    %151 = arith.addi %95, %150 : vector<1x256xi32>
    %c16_i32_57 = arith.constant 16 : i32
    %152 = vector.broadcast %c16_i32_57 : i32 to vector<1x256xi32>
    %153 = arith.cmpi slt, %151, %152 : vector<1x256xi32>
    %154 = arith.andi %149, %153 : vector<1x256xi1>
    %cst_58 = arith.constant 1.000000e+00 : f32
    %cst_59 = arith.constant 0.000000e+00 : f32
    %155 = vector.broadcast %cst_58 : f32 to vector<1x256xf32>
    %156 = vector.broadcast %cst_59 : f32 to vector<1x256xf32>
    %157 = arith.select %154, %155, %156 : vector<1x256xi1>, vector<1x256xf32>
    %158 = vector.broadcast %157 : vector<1x256xf32> to vector<4x256xf32>
    %159 = arith.mulf %145, %158 : vector<4x256xf32>
    %c16 = arith.constant 16 : index
    %c0_60 = arith.constant 0 : index
    %160 = vector.load %arg6[%c16, %c0_60] : memref<32x256xf32, #tpu.memory_space<vmem>>, vector<4x256xf32>
    tpu.vector_store %arg6[%c16, %c0_60], %159 {strides = array<i32>} : memref<32x256xf32, #tpu.memory_space<vmem>>, vector<4x256xf32>,
    %c254_i32 = arith.constant 254 : i32
    %161 = tpu.dynamic_rotate %96 by %c254_i32 dim 1 : vector<4x256xf32>, i32 -> vector<4x256xf32>
    %c2_i32_61 = arith.constant 2 : i32
    %162 = vector.broadcast %c2_i32_61 : i32 to vector<1x256xi32>
    %163 = arith.addi %95, %162 : vector<1x256xi32>
    %c0_i32_62 = arith.constant 0 : i32
    %164 = vector.broadcast %c0_i32_62 : i32 to vector<1x256xi32>
    %165 = arith.cmpi sge, %163, %164 : vector<1x256xi32>
    %c2_i32_63 = arith.constant 2 : i32
    %166 = vector.broadcast %c2_i32_63 : i32 to vector<1x256xi32>
    %167 = arith.addi %95, %166 : vector<1x256xi32>
    %c16_i32_64 = arith.constant 16 : i32
    %168 = vector.broadcast %c16_i32_64 : i32 to vector<1x256xi32>
    %169 = arith.cmpi slt, %167, %168 : vector<1x256xi32>
    %170 = arith.andi %165, %169 : vector<1x256xi1>
    %cst_65 = arith.constant 1.000000e+00 : f32
    %cst_66 = arith.constant 0.000000e+00 : f32
    %171 = vector.broadcast %cst_65 : f32 to vector<1x256xf32>
    %172 = vector.broadcast %cst_66 : f32 to vector<1x256xf32>
    %173 = arith.select %170, %171, %172 : vector<1x256xi1>, vector<1x256xf32>
    %174 = vector.broadcast %173 : vector<1x256xf32> to vector<4x256xf32>
    %175 = arith.mulf %161, %174 : vector<4x256xf32>
    %c20 = arith.constant 20 : index
    %c0_67 = arith.constant 0 : index
    %176 = vector.load %arg6[%c20, %c0_67] : memref<32x256xf32, #tpu.memory_space<vmem>>, vector<4x256xf32>
    tpu.vector_store %arg6[%c20, %c0_67], %175 {strides = array<i32>} : memref<32x256xf32, #tpu.memory_space<vmem>>, vector<4x256xf32>,
    %c253_i32 = arith.constant 253 : i32
    %177 = tpu.dynamic_rotate %96 by %c253_i32 dim 1 : vector<4x256xf32>, i32 -> vector<4x256xf32>
    %c3_i32_68 = arith.constant 3 : i32
    %178 = vector.broadcast %c3_i32_68 : i32 to vector<1x256xi32>
    %179 = arith.addi %95, %178 : vector<1x256xi32>
    %c0_i32_69 = arith.constant 0 : i32
    %180 = vector.broadcast %c0_i32_69 : i32 to vector<1x256xi32>
    %181 = arith.cmpi sge, %179, %180 : vector<1x256xi32>
    %c3_i32_70 = arith.constant 3 : i32
    %182 = vector.broadcast %c3_i32_70 : i32 to vector<1x256xi32>
    %183 = arith.addi %95, %182 : vector<1x256xi32>
    %c16_i32_71 = arith.constant 16 : i32
    %184 = vector.broadcast %c16_i32_71 : i32 to vector<1x256xi32>
    %185 = arith.cmpi slt, %183, %184 : vector<1x256xi32>
    %186 = arith.andi %181, %185 : vector<1x256xi1>
    %cst_72 = arith.constant 1.000000e+00 : f32
    %cst_73 = arith.constant 0.000000e+00 : f32
    %187 = vector.broadcast %cst_72 : f32 to vector<1x256xf32>
    %188 = vector.broadcast %cst_73 : f32 to vector<1x256xf32>
    %189 = arith.select %186, %187, %188 : vector<1x256xi1>, vector<1x256xf32>
    %190 = vector.broadcast %189 : vector<1x256xf32> to vector<4x256xf32>
    %191 = arith.mulf %177, %190 : vector<4x256xf32>
    %c24 = arith.constant 24 : index
    %c0_74 = arith.constant 0 : index
    %192 = vector.load %arg6[%c24, %c0_74] : memref<32x256xf32, #tpu.memory_space<vmem>>, vector<4x256xf32>
    tpu.vector_store %arg6[%c24, %c0_74], %191 {strides = array<i32>} : memref<32x256xf32, #tpu.memory_space<vmem>>, vector<4x256xf32>,
    %cst_75 = arith.constant 0.000000e+00 : f32
    %193 = vector.broadcast %cst_75 : f32 to vector<4x256xf32>
    %c28 = arith.constant 28 : index
    %c0_76 = arith.constant 0 : index
    %194 = vector.load %arg6[%c28, %c0_76] : memref<32x256xf32, #tpu.memory_space<vmem>>, vector<4x256xf32>
    tpu.vector_store %arg6[%c28, %c0_76], %193 {strides = array<i32>} : memref<32x256xf32, #tpu.memory_space<vmem>>, vector<4x256xf32>,
    %c0_77 = arith.constant 0 : index
    %c0_78 = arith.constant 0 : index
    %195 = vector.load %arg4[%c0_77, %c0_78] : memref<16x32xf32, #tpu.memory_space<vmem>>, vector<16x32xf32>
    %c0_79 = arith.constant 0 : index
    %c0_80 = arith.constant 0 : index
    %196 = vector.load %arg6[%c0_79, %c0_80] : memref<32x256xf32, #tpu.memory_space<vmem>>, vector<32x256xf32>
    %cst_81 = arith.constant dense<0.000000e+00> : vector<16x256xf32>
    %197 = tpu.matmul %195, %196, %cst_81 {dimension_numbers = #tpu.dot_dimension_numbers<[1], [0], [0], [1], [0, 0, 1, 1], [], []>} : vector<16x32xf32>, vector<32x256xf32>, vector<16x256xf32> -> vector<16x256xf32>
    %198 = vector.extract_strided_slice %197 {offsets = [6, 0], sizes = [2, 256], strides = [1, 1]} : vector<16x256xf32> to vector<2x256xf32>
    %199 = vector.extract_strided_slice %197 {offsets = [0, 0], sizes = [2, 256], strides = [1, 1]} : vector<16x256xf32> to vector<2x256xf32>
    %c48_i32 = arith.constant 48 : i32
    %200 = tpu.dynamic_rotate %199 by %c48_i32 dim 1 : vector<2x256xf32>, i32 -> vector<2x256xf32>
    %c-48_i32 = arith.constant -48 : i32
    %201 = vector.broadcast %c-48_i32 : i32 to vector<1x256xi32>
    %202 = arith.addi %79, %201 : vector<1x256xi32>
    %c0_i32_82 = arith.constant 0 : i32
    %203 = vector.broadcast %c0_i32_82 : i32 to vector<1x256xi32>
    %204 = arith.cmpi sge, %202, %203 : vector<1x256xi32>
    %c-48_i32_83 = arith.constant -48 : i32
    %205 = vector.broadcast %c-48_i32_83 : i32 to vector<1x256xi32>
    %206 = arith.addi %79, %205 : vector<1x256xi32>
    %c256_i32 = arith.constant 256 : i32
    %207 = vector.broadcast %c256_i32 : i32 to vector<1x256xi32>
    %208 = arith.cmpi slt, %206, %207 : vector<1x256xi32>
    %209 = arith.andi %204, %208 : vector<1x256xi1>
    %cst_84 = arith.constant 1.000000e+00 : f32
    %cst_85 = arith.constant 0.000000e+00 : f32
    %210 = vector.broadcast %cst_84 : f32 to vector<1x256xf32>
    %211 = vector.broadcast %cst_85 : f32 to vector<1x256xf32>
    %212 = arith.select %209, %210, %211 : vector<1x256xi1>, vector<1x256xf32>
    %213 = vector.broadcast %212 : vector<1x256xf32> to vector<2x256xf32>
    %214 = arith.mulf %200, %213 : vector<2x256xf32>
    %215 = arith.addf %198, %214 : vector<2x256xf32>
    %216 = vector.extract_strided_slice %197 {offsets = [2, 0], sizes = [2, 256], strides = [1, 1]} : vector<16x256xf32> to vector<2x256xf32>
    %c32_i32 = arith.constant 32 : i32
    %217 = tpu.dynamic_rotate %216 by %c32_i32 dim 1 : vector<2x256xf32>, i32 -> vector<2x256xf32>
    %c-32_i32 = arith.constant -32 : i32
    %218 = vector.broadcast %c-32_i32 : i32 to vector<1x256xi32>
    %219 = arith.addi %79, %218 : vector<1x256xi32>
    %c0_i32_86 = arith.constant 0 : i32
    %220 = vector.broadcast %c0_i32_86 : i32 to vector<1x256xi32>
    %221 = arith.cmpi sge, %219, %220 : vector<1x256xi32>
    %c-32_i32_87 = arith.constant -32 : i32
    %222 = vector.broadcast %c-32_i32_87 : i32 to vector<1x256xi32>
    %223 = arith.addi %79, %222 : vector<1x256xi32>
    %c256_i32_88 = arith.constant 256 : i32
    %224 = vector.broadcast %c256_i32_88 : i32 to vector<1x256xi32>
    %225 = arith.cmpi slt, %223, %224 : vector<1x256xi32>
    %226 = arith.andi %221, %225 : vector<1x256xi1>
    %cst_89 = arith.constant 1.000000e+00 : f32
    %cst_90 = arith.constant 0.000000e+00 : f32
    %227 = vector.broadcast %cst_89 : f32 to vector<1x256xf32>
    %228 = vector.broadcast %cst_90 : f32 to vector<1x256xf32>
    %229 = arith.select %226, %227, %228 : vector<1x256xi1>, vector<1x256xf32>
    %230 = vector.broadcast %229 : vector<1x256xf32> to vector<2x256xf32>
    %231 = arith.mulf %217, %230 : vector<2x256xf32>
    %232 = arith.addf %215, %231 : vector<2x256xf32>
    %233 = vector.extract_strided_slice %197 {offsets = [4, 0], sizes = [2, 256], strides = [1, 1]} : vector<16x256xf32> to vector<2x256xf32>
    %c16_i32_91 = arith.constant 16 : i32
    %234 = tpu.dynamic_rotate %233 by %c16_i32_91 dim 1 : vector<2x256xf32>, i32 -> vector<2x256xf32>
    %c-16_i32 = arith.constant -16 : i32
    %235 = vector.broadcast %c-16_i32 : i32 to vector<1x256xi32>
    %236 = arith.addi %79, %235 : vector<1x256xi32>
    %c0_i32_92 = arith.constant 0 : i32
    %237 = vector.broadcast %c0_i32_92 : i32 to vector<1x256xi32>
    %238 = arith.cmpi sge, %236, %237 : vector<1x256xi32>
    %c-16_i32_93 = arith.constant -16 : i32
    %239 = vector.broadcast %c-16_i32_93 : i32 to vector<1x256xi32>
    %240 = arith.addi %79, %239 : vector<1x256xi32>
    %c256_i32_94 = arith.constant 256 : i32
    %241 = vector.broadcast %c256_i32_94 : i32 to vector<1x256xi32>
    %242 = arith.cmpi slt, %240, %241 : vector<1x256xi32>
    %243 = arith.andi %238, %242 : vector<1x256xi1>
    %cst_95 = arith.constant 1.000000e+00 : f32
    %cst_96 = arith.constant 0.000000e+00 : f32
    %244 = vector.broadcast %cst_95 : f32 to vector<1x256xf32>
    %245 = vector.broadcast %cst_96 : f32 to vector<1x256xf32>
    %246 = arith.select %243, %244, %245 : vector<1x256xi1>, vector<1x256xf32>
    %247 = vector.broadcast %246 : vector<1x256xf32> to vector<2x256xf32>
    %248 = arith.mulf %234, %247 : vector<2x256xf32>
    %249 = arith.addf %232, %248 : vector<2x256xf32>
    %250 = vector.extract_strided_slice %197 {offsets = [8, 0], sizes = [2, 256], strides = [1, 1]} : vector<16x256xf32> to vector<2x256xf32>
    %c240_i32 = arith.constant 240 : i32
    %251 = tpu.dynamic_rotate %250 by %c240_i32 dim 1 : vector<2x256xf32>, i32 -> vector<2x256xf32>
    %c16_i32_97 = arith.constant 16 : i32
    %252 = vector.broadcast %c16_i32_97 : i32 to vector<1x256xi32>
    %253 = arith.addi %79, %252 : vector<1x256xi32>
    %c0_i32_98 = arith.constant 0 : i32
    %254 = vector.broadcast %c0_i32_98 : i32 to vector<1x256xi32>
    %255 = arith.cmpi sge, %253, %254 : vector<1x256xi32>
    %c16_i32_99 = arith.constant 16 : i32
    %256 = vector.broadcast %c16_i32_99 : i32 to vector<1x256xi32>
    %257 = arith.addi %79, %256 : vector<1x256xi32>
    %c256_i32_100 = arith.constant 256 : i32
    %258 = vector.broadcast %c256_i32_100 : i32 to vector<1x256xi32>
    %259 = arith.cmpi slt, %257, %258 : vector<1x256xi32>
    %260 = arith.andi %255, %259 : vector<1x256xi1>
    %cst_101 = arith.constant 1.000000e+00 : f32
    %cst_102 = arith.constant 0.000000e+00 : f32
    %261 = vector.broadcast %cst_101 : f32 to vector<1x256xf32>
    %262 = vector.broadcast %cst_102 : f32 to vector<1x256xf32>
    %263 = arith.select %260, %261, %262 : vector<1x256xi1>, vector<1x256xf32>
    %264 = vector.broadcast %263 : vector<1x256xf32> to vector<2x256xf32>
    %265 = arith.mulf %251, %264 : vector<2x256xf32>
    %266 = arith.addf %249, %265 : vector<2x256xf32>
    %267 = vector.extract_strided_slice %197 {offsets = [10, 0], sizes = [2, 256], strides = [1, 1]} : vector<16x256xf32> to vector<2x256xf32>
    %c224_i32 = arith.constant 224 : i32
    %268 = tpu.dynamic_rotate %267 by %c224_i32 dim 1 : vector<2x256xf32>, i32 -> vector<2x256xf32>
    %c32_i32_103 = arith.constant 32 : i32
    %269 = vector.broadcast %c32_i32_103 : i32 to vector<1x256xi32>
    %270 = arith.addi %79, %269 : vector<1x256xi32>
    %c0_i32_104 = arith.constant 0 : i32
    %271 = vector.broadcast %c0_i32_104 : i32 to vector<1x256xi32>
    %272 = arith.cmpi sge, %270, %271 : vector<1x256xi32>
    %c32_i32_105 = arith.constant 32 : i32
    %273 = vector.broadcast %c32_i32_105 : i32 to vector<1x256xi32>
    %274 = arith.addi %79, %273 : vector<1x256xi32>
    %c256_i32_106 = arith.constant 256 : i32
    %275 = vector.broadcast %c256_i32_106 : i32 to vector<1x256xi32>
    %276 = arith.cmpi slt, %274, %275 : vector<1x256xi32>
    %277 = arith.andi %272, %276 : vector<1x256xi1>
    %cst_107 = arith.constant 1.000000e+00 : f32
    %cst_108 = arith.constant 0.000000e+00 : f32
    %278 = vector.broadcast %cst_107 : f32 to vector<1x256xf32>
    %279 = vector.broadcast %cst_108 : f32 to vector<1x256xf32>
    %280 = arith.select %277, %278, %279 : vector<1x256xi1>, vector<1x256xf32>
    %281 = vector.broadcast %280 : vector<1x256xf32> to vector<2x256xf32>
    %282 = arith.mulf %268, %281 : vector<2x256xf32>
    %283 = arith.addf %266, %282 : vector<2x256xf32>
    %284 = vector.extract_strided_slice %197 {offsets = [12, 0], sizes = [2, 256], strides = [1, 1]} : vector<16x256xf32> to vector<2x256xf32>
    %c208_i32 = arith.constant 208 : i32
    %285 = tpu.dynamic_rotate %284 by %c208_i32 dim 1 : vector<2x256xf32>, i32 -> vector<2x256xf32>
    %c48_i32_109 = arith.constant 48 : i32
    %286 = vector.broadcast %c48_i32_109 : i32 to vector<1x256xi32>
    %287 = arith.addi %79, %286 : vector<1x256xi32>
    %c0_i32_110 = arith.constant 0 : i32
    %288 = vector.broadcast %c0_i32_110 : i32 to vector<1x256xi32>
    %289 = arith.cmpi sge, %287, %288 : vector<1x256xi32>
    %c48_i32_111 = arith.constant 48 : i32
    %290 = vector.broadcast %c48_i32_111 : i32 to vector<1x256xi32>
    %291 = arith.addi %79, %290 : vector<1x256xi32>
    %c256_i32_112 = arith.constant 256 : i32
    %292 = vector.broadcast %c256_i32_112 : i32 to vector<1x256xi32>
    %293 = arith.cmpi slt, %291, %292 : vector<1x256xi32>
    %294 = arith.andi %289, %293 : vector<1x256xi1>
    %cst_113 = arith.constant 1.000000e+00 : f32
    %cst_114 = arith.constant 0.000000e+00 : f32
    %295 = vector.broadcast %cst_113 : f32 to vector<1x256xf32>
    %296 = vector.broadcast %cst_114 : f32 to vector<1x256xf32>
    %297 = arith.select %294, %295, %296 : vector<1x256xi1>, vector<1x256xf32>
    %298 = vector.broadcast %297 : vector<1x256xf32> to vector<2x256xf32>
    %299 = arith.mulf %285, %298 : vector<2x256xf32>
    %300 = arith.addf %283, %299 : vector<2x256xf32>
    %301 = arith.negf %300 : vector<2x256xf32>
    %302 = math.exp %301 : vector<2x256xf32>
    %cst_115 = arith.constant 1.000000e+00 : f32
    %303 = vector.broadcast %cst_115 : f32 to vector<2x256xf32>
    %304 = arith.addf %303, %302 : vector<2x256xf32>
    %305 = arith.divf %303, %304 : vector<2x256xf32>
    %306 = vector.extract_strided_slice %305 {offsets = [0, 0], sizes = [1, 256], strides = [1, 1]} : vector<2x256xf32> to vector<1x256xf32>
    %307 = vector.broadcast %306 : vector<1x256xf32> to vector<16x256xf32>
    %308 = arith.mulf %35, %307 : vector<16x256xf32>
    %c0_116 = arith.constant 0 : index
    %c0_117 = arith.constant 0 : index
    %309 = vector.load %arg5[%c0_116, %c0_117] : memref<32x256xf32, #tpu.memory_space<vmem>>, vector<16x256xf32>
    tpu.vector_store %arg5[%c0_116, %c0_117], %308 {strides = array<i32>} : memref<32x256xf32, #tpu.memory_space<vmem>>, vector<16x256xf32>,
    %310 = vector.extract_strided_slice %305 {offsets = [1, 0], sizes = [1, 256], strides = [1, 1]} : vector<2x256xf32> to vector<1x256xf32>
    %311 = vector.broadcast %310 : vector<1x256xf32> to vector<16x256xf32>
    %312 = arith.mulf %70, %311 : vector<16x256xf32>
    %c16_118 = arith.constant 16 : index
    %c0_119 = arith.constant 0 : index
    %313 = vector.load %arg5[%c16_118, %c0_119] : memref<32x256xf32, #tpu.memory_space<vmem>>, vector<16x256xf32>
    tpu.vector_store %arg5[%c16_118, %c0_119], %312 {strides = array<i32>} : memref<32x256xf32, #tpu.memory_space<vmem>>, vector<16x256xf32>,
    return
  }
  func.func @transform_0(%arg0: i32) -> (i32, i32) {
    %c0_i32 = arith.constant 0 : i32
    %c0_i32_0 = arith.constant 0 : i32
    return %arg0, %c0_i32 : i32, i32
  }
  func.func @transform_1(%arg0: i32) -> (i32, i32) {
    %c0_i32 = arith.constant 0 : i32
    %c0_i32_0 = arith.constant 0 : i32
    %c0_i32_1 = arith.constant 0 : i32
    return %c0_i32, %c0_i32_0 : i32, i32
  }
  func.func @transform_2(%arg0: i32) -> (i32, i32) {
    %c0_i32 = arith.constant 0 : i32
    %c0_i32_0 = arith.constant 0 : i32
    %c0_i32_1 = arith.constant 0 : i32
    return %c0_i32, %c0_i32_0 : i32, i32
  }
  func.func @transform_3(%arg0: i32) -> (i32, i32) {
    %c0_i32 = arith.constant 0 : i32
    %c0_i32_0 = arith.constant 0 : i32
    %c0_i32_1 = arith.constant 0 : i32
    return %c0_i32, %c0_i32_0 : i32, i32
  }
  func.func @transform_4(%arg0: i32) -> (i32, i32) {
    %c0_i32 = arith.constant 0 : i32
    %c0_i32_0 = arith.constant 0 : i32
    return %arg0, %c0_i32 : i32, i32
  }
}

</mosaic_0001>

<llo_original>
// kernel: cbam_block.1
$region0: #{cbam_block.1}
  #allocation0 [shape = 'u32[]', space=smem, size = 0x4, offset = 0x4, fixed_abs, tag = 'smem constant byte address 0x4 - core index']
  #allocation1 [shape = 'u32[144,128]{1,0:T(1,128)}', space=vmem, size = 0x12000, scoped, tag = 'internal scratch']
  #allocation2 [shape = 'f32[32,256]{1,0:T(8,128)}', space=vmem, size = 0x8000, scoped, tag = 'scratch operand']
  %s0 = inlined_call_operand.vmem [shape: f32[64,256], index: 0, kind: input, shape index: {}]
  %s1 = inlined_call_operand.vmem [shape: f32[16,2], index: 1, kind: input, shape index: {}]
  %s2 = inlined_call_operand.vmem [shape: f32[16,2], index: 2, kind: input, shape index: {}]
  %s3 = inlined_call_operand.vmem [shape: f32[16,32], index: 3, kind: input, shape index: {}]
  %s4 = inlined_call_operand.vmem [shape: f32[64,256], index: 4, kind: output, shape index: {}]
  %s5 = sld [smem:[#allocation0]]
  $region49: #{cbam_block.1} parent=0
    _
  %s7 = ssub.s32 1, %s5
  %s8 = scalar_select 0, %s7, %s5
  loop: start=0, step=1, limit=4
  $region2: #{cbam_block.1} parent=0 // loop_pre_header
    _
  $region3: #{cbam_block.1} parent=0 // loop_header
    %s10 = sphi 0, %s14
    %p11 = scmp.ge.s32.totalorder %s10, 4
    %s20 = sphi 0, %s22
    %s23 = sphi 0, %s20
    %s24 = sphi 0, %s23
    %s40 = sphi 0, %s24
    %s44 = sphi 0, %s44
    %s46 = sphi 0, %s44
    %s47 = sphi 0, %s46
    %s61 = sphi 0, %s47
    %s65 = sphi 0, %s65
    %s67 = sphi 0, %s65
    %s68 = sphi 0, %s67
    %s82 = sphi 0, %s68
    %s86 = sphi 0, %s86
    %s88 = sphi 0, %s86
    %s89 = sphi 0, %s88
    %s103 = sphi 0, %s89
    %s109 = sphi 0, %s111
    %s112 = sphi 0, %s109
    %s113 = sphi 0, %s112
    %s129 = sphi 0, %s113
  $region4: #{cbam_block.1} parent=0 // loop_header_branch
    %13 = sbr.rel (%p11) target = $region8
  $region5: #{cbam_block.1} parent=0 // loop_body
    %s15 = ssub.s32 %s10, 1
    %s16 = ssub.s32 %s10, 2
    %s17 = sadd.s32 %s10, 1
    %s18 = ssub.s32 %s10, %s17
    %p19 = scmp.eq.s32.totalorder %s18, 0
    %s21 = sadd.s32 %s20, 1
    %s22 = scalar_select %p19, %s20, %s21
    %p25 = pneg %p19
    %p26 = scmp.eq.s32.totalorder %s10, 1
    %p27 = por %p25, %p26
    %p28 = scmp.ne.s32.totalorder %s20, %s23
    %p29 = scmp.eq.s32.totalorder %s10, 0
    %p30 = por %p28, %p29
    %p31 = scmp.ne.s32.totalorder %s20, %s23
    %p32 = scmp.eq.s32.totalorder %s15, 1
    %p33 = por %p31, %p32
    %p34 = scmp.ne.s32.totalorder %s23, %s24
    %p35 = scmp.eq.s32.totalorder %s15, 0
    %p36 = por %p34, %p35
    %p37 = scmp.ne.s32.totalorder %s23, %s24
    %p38 = scmp.eq.s32.totalorder %s16, 1
    %p39 = por %p37, %p38
    %p41 = scmp.ne.s32.totalorder %s24, %s40
    %p42 = scmp.eq.s32.totalorder %s16, 0
    %p43 = por %p41, %p42
    %s45 = sadd.s32 %s44, 1
    %p48 = scmp.eq.s32.totalorder %s10, 1
    %p49 = scmp.ne.s32.totalorder %s44, %s46
    %p50 = scmp.eq.s32.totalorder %s10, 0
    %p51 = por %p49, %p50
    %p52 = scmp.ne.s32.totalorder %s44, %s46
    %p53 = scmp.eq.s32.totalorder %s15, 1
    %p54 = por %p52, %p53
    %p55 = scmp.ne.s32.totalorder %s46, %s47
    %p56 = scmp.eq.s32.totalorder %s15, 0
    %p57 = por %p55, %p56
    %p58 = scmp.ne.s32.totalorder %s46, %s47
    %p59 = scmp.eq.s32.totalorder %s16, 1
    %p60 = por %p58, %p59
    %p62 = scmp.ne.s32.totalorder %s47, %s61
    %p63 = scmp.eq.s32.totalorder %s16, 0
    %p64 = por %p62, %p63
    %s66 = sadd.s32 %s65, 1
    %p69 = scmp.eq.s32.totalorder %s10, 1
    %p70 = scmp.ne.s32.totalorder %s65, %s67
    %p71 = scmp.eq.s32.totalorder %s10, 0
    %p72 = por %p70, %p71
    %p73 = scmp.ne.s32.totalorder %s65, %s67
    %p74 = scmp.eq.s32.totalorder %s15, 1
    %p75 = por %p73, %p74
    %p76 = scmp.ne.s32.totalorder %s67, %s68
    %p77 = scmp.eq.s32.totalorder %s15, 0
    %p78 = por %p76, %p77
    %p79 = scmp.ne.s32.totalorder %s67, %s68
    %p80 = scmp.eq.s32.totalorder %s16, 1
    %p81 = por %p79, %p80
    %p83 = scmp.ne.s32.totalorder %s68, %s82
    %p84 = scmp.eq.s32.totalorder %s16, 0
    %p85 = por %p83, %p84
    %s87 = sadd.s32 %s86, 1
    %p90 = scmp.eq.s32.totalorder %s10, 1
    %p91 = scmp.ne.s32.totalorder %s86, %s88
    %p92 = scmp.eq.s32.totalorder %s10, 0
    %p93 = por %p91, %p92
    %p94 = scmp.ne.s32.totalorder %s86, %s88
    %p95 = scmp.eq.s32.totalorder %s15, 1
    %p96 = por %p94, %p95
    %p97 = scmp.ne.s32.totalorder %s88, %s89
    %p98 = scmp.eq.s32.totalorder %s15, 0
    %p99 = por %p97, %p98
    %p100 = scmp.ne.s32.totalorder %s88, %s89
    %p101 = scmp.eq.s32.totalorder %s16, 1
    %p102 = por %p100, %p101
    %p104 = scmp.ne.s32.totalorder %s89, %s103
    %p105 = scmp.eq.s32.totalorder %s16, 0
    %p106 = por %p104, %p105
    %s107 = ssub.s32 %s10, %s17
    %p108 = scmp.eq.s32.totalorder %s107, 0
    %s110 = sadd.s32 %s109, 1
    %s111 = scalar_select %p108, %s109, %s110
    %p114 = pneg %p108
    %p115 = scmp.eq.s32.totalorder %s10, 1
    %p116 = por %p114, %p115
    %p117 = scmp.ne.s32.totalorder %s109, %s112
    %p118 = scmp.eq.s32.totalorder %s10, 0
    %p119 = por %p117, %p118
    %p120 = scmp.ne.s32.totalorder %s109, %s112
    %p121 = scmp.eq.s32.totalorder %s15, 1
    %p122 = por %p120, %p121
    %p123 = scmp.ne.s32.totalorder %s112, %s113
    %p124 = scmp.eq.s32.totalorder %s15, 0
    %p125 = por %p123, %p124
    %p126 = scmp.ne.s32.totalorder %s112, %s113
    %p127 = scmp.eq.s32.totalorder %s16, 1
    %p128 = por %p126, %p127
    %p130 = scmp.ne.s32.totalorder %s113, %s129
    %p131 = scmp.eq.s32.totalorder %s16, 0
    %p132 = por %p130, %p131
    %p133 = scmp.le.s32.totalorder 1, %s10
    %p134 = scmp.lt.s32.totalorder %s10, 3
    %p135 = pnand %p133, %p134
    %p136 = pneg %p135
    // Predicated region
    $region9: #{cbam_block.1} parent=5 // pred_check
      _
    $region10: #{cbam_block.1} parent=5 // pred_check_branch
      %138 = sbr.rel (%p135) target = $region12
    $region11: #{cbam_block.1} parent=5 // pred_region
      %s139 = ssub.s32 %s10, 1
      // Predicated region
      $region13: #{cbam_block.1} parent=11 // pred_check
        %p140 = pneg %p57
      $region14: #{cbam_block.1} parent=11 // pred_check_branch
        %142 = sbr.rel (%p140) target = $region16
      $region15: #{cbam_block.1} parent=11 // pred_region
        _
      $region16: #{cbam_block.1} parent=11 // pred_fallthru
        _
      // Predicated region
      $region17: #{cbam_block.1} parent=11 // pred_check
        %p143 = pneg %p78
      $region18: #{cbam_block.1} parent=11 // pred_check_branch
        %145 = sbr.rel (%p143) target = $region20
      $region19: #{cbam_block.1} parent=11 // pred_region
        _
      $region20: #{cbam_block.1} parent=11 // pred_fallthru
        _
      // Predicated region
      $region21: #{cbam_block.1} parent=11 // pred_check
        %p146 = pneg %p99
      $region22: #{cbam_block.1} parent=11 // pred_check_branch
        %148 = sbr.rel (%p146) target = $region24
      $region23: #{cbam_block.1} parent=11 // pred_region
        _
      $region24: #{cbam_block.1} parent=11 // pred_fallthru
        _
    $region12: #{cbam_block.1} parent=5 // pred_fallthru
      _
    %p149 = scmp.lt.s32.totalorder %s10, 2
    // Predicated region
    $region25: #{cbam_block.1} parent=5 // pred_check
      %p150 = pneg %p149
    $region26: #{cbam_block.1} parent=5 // pred_check_branch
      %152 = sbr.rel (%p150) target = $region28
    $region27: #{cbam_block.1} parent=5 // pred_region
      // Predicated region
      $region29: #{cbam_block.1} parent=27 // pred_check
        %p153 = pneg %p30
      $region30: #{cbam_block.1} parent=27 // pred_check_branch
        %155 = sbr.rel (%p153) target = $region32
      $region31: #{cbam_block.1} parent=27 // pred_region
        %s156 = smul.u32 4, %s10
        %p157 = scmp.lt.s32.totalorder %s156, 7
        %s158 = scalar_select %p157, %s156, 7
        %s159 = smul.addr %s158, 2
        %s160 = smul.addr %s159, 8
        %s161 = scalar_lea.vmem %s0, %s160
        %s162 = smul.u32 4, %s10
      $region32: #{cbam_block.1} parent=27 // pred_fallthru
        _
    $region28: #{cbam_block.1} parent=5 // pred_fallthru
      _
    %p163 = scmp.le.s32.totalorder 1, %s10
    %p164 = scmp.lt.s32.totalorder %s10, 3
    %p165 = pnand %p163, %p164
    %p166 = pneg %p165
    // Predicated region
    $region33: #{cbam_block.1} parent=5 // pred_check
      _
    $region34: #{cbam_block.1} parent=5 // pred_check_branch
      %168 = sbr.rel (%p165) target = $region36
    $region35: #{cbam_block.1} parent=5 // pred_region
      %s169 = ssub.s32 %s10, 1
      %s170 = smul.u32 4, %s15
      %p171 = scmp.lt.s32.totalorder %s170, 7
      %s172 = scalar_select %p171, %s170, 7
      %s173 = smul.addr %s172, 2
      %s174 = smul.addr %s173, 8
      %s175 = scalar_lea.vmem %s0, %s174
      %p176 = pneg %p36
      %p177 = pneg %p33
      %p178 = pneg %p57
      %p179 = pneg %p54
      %p180 = pneg %p78
      %p181 = pneg %p75
      %p182 = pneg %p99
      %p183 = pneg %p96
      %p184 = pneg %p125
      %p185 = pneg %p122
      %s186 = smul.u32 4, %s15
      %p187 = scmp.lt.s32.totalorder %s186, 7
      %s188 = scalar_select %p187, %s186, 7
      %s189 = smul.addr %s188, 2
      %s190 = smul.addr %s189, 8
      %s191 = scalar_lea.vmem %s4, %s190
      %s192 = smul.u32 4, %s15
      %p193 = scmp.lt.s32.totalorder %s192, 7
      %s194 = scalar_select %p193, %s192, 7
      %s195 = smul.addr %s194, 2
      %s196 = smul.addr %s195, 8
      %s197 = scalar_lea.vmem %s0, %s196
      %s198 = smul.u32 4, %s15
      %s199 = smul.u32 4, %s15
      %p200 = scmp.lt.s32.totalorder %s199, 7
      %s201 = scalar_select %p200, %s199, 7
      %s202 = smul.addr %s201, 2
      %s203 = smul.addr %s202, 8
      %s204 = scalar_lea.vmem %s4, %s203
      %s205 = smul.u32 4, %s15
      %v206 = vld [vmem:[%s197] sm:$0xff]
      %v207 = vld [vmem:[%s197 + $0x8] sm:$0xff]
      %v208 = vld [vmem:[%s197 + $0x10] sm:$0xff]
      %v209 = vld [vmem:[%s197 + $0x18] sm:$0xff]
      %v210 = vld [vmem:[%s197 + $0x20] sm:$0xff]
      %v211 = vld [vmem:[%s197 + $0x28] sm:$0xff]
      %v212 = vld [vmem:[%s197 + $0x30] sm:$0xff]
      %v213 = vld [vmem:[%s197 + $0x38] sm:$0xff]
      %v214 = vadd.f32 %v206, %v207
      %215 = vadd.xlane.f32.xlu0 %v214
      %v216 = vpop.xlane.xlu0 %215
      %v217 = vadd.f32 %v208, %v209
      %218 = vadd.xlane.f32.xlu0 %v217
      %v219 = vpop.xlane.xlu0 %218
      %v220 = vadd.f32 %v210, %v211
      %221 = vadd.xlane.f32.xlu0 %v220
      %v222 = vpop.xlane.xlu0 %221
      %v223 = vadd.f32 %v212, %v213
      %224 = vadd.xlane.f32.xlu0 %v223
      %v225 = vpop.xlane.xlu0 %224
      %v226 = vmul.f32 %v216, 0.00390625
      %v227 = vmul.f32 %v219, 0.00390625
      %v228 = vmul.f32 %v222, 0.00390625
      %v229 = vmul.f32 %v225, 0.00390625
      %v230 = vmax.f32 %v206, %v207
      %231 = vmax.xlane.f32.xlu0 %v230
      %v232 = vpop.xlane.xlu0 %231
      %v233 = vmax.f32 %v208, %v209
      %234 = vmax.xlane.f32.xlu0 %v233
      %v235 = vpop.xlane.xlu0 %234
      %v236 = vmax.f32 %v210, %v211
      %237 = vmax.xlane.f32.xlu0 %v236
      %v238 = vpop.xlane.xlu0 %237
      %v239 = vmax.f32 %v212, %v213
      %240 = vmax.xlane.f32.xlu0 %v239
      %v241 = vpop.xlane.xlu0 %240
      %v242 = vld [vmem:[%s1] sm:$0xff]
      %v243 = vld [vmem:[%s1 + $0x8] sm:$0xff]
      %v244 = vld [vmem:[%s2] sm:$0xff]
      %v245 = vld [vmem:[%s2 + $0x8] sm:$0xff]
      %v246 = vmul.f32 %v242, %v226
      %v247 = vmul.f32 %v243, %v227
      %vm248 = vcmask 15360
      %v249 = vsel %vm248, %v246, 0.0
      %v250 = vsel %vm248, %v247, 0.0
      %v251 = vadd.f32 %v249, %v250
      %v252 = vrot.slane %v251, 4
      %v253 = vadd.f32 %v251, %v252
      %v254 = vrot.slane %v253, 2
      %v255 = vadd.f32 %v253, %v254
      %v256 = vrot.slane %v255, 1
      %v257 = vadd.f32 %v255, %v256
      %v258 = vmax.f32 %v257, 0.0
      %v259 = vmul.f32 %v242, %v232
      %v260 = vmul.f32 %v243, %v235
      %v261 = vsel %vm248, %v259, 0.0
      %v262 = vsel %vm248, %v260, 0.0
      %v263 = vadd.f32 %v261, %v262
      %v264 = vrot.slane %v263, 4
      %v265 = vadd.f32 %v263, %v264
      %v266 = vrot.slane %v265, 2
      %v267 = vadd.f32 %v265, %v266
      %v268 = vrot.slane %v267, 1
      %v269 = vadd.f32 %v267, %v268
      %v270 = vmax.f32 %v269, 0.0
      %v271 = vadd.f32 %v258, %v270
      %v272 = vmul.f32 %v244, %v271
      %v273 = vmul.f32 %v245, %v271
      %v274 = vsel %vm248, %v272, 0.0
      %275 = vadd.xlane.f32.xlu0 %v274
      %v276 = vpop.xlane.xlu0 %275
      %v277 = vsel %vm248, %v273, 0.0
      %278 = vadd.xlane.f32.xlu0 %v277
      %v279 = vpop.xlane.xlu0 %278
      %v280 = vxor.u32 %v276, 2147483648
      %v281 = vxor.u32 %v279, 2147483648
      %v282 = vmul.f32 %v280, 1.442695
      %v283 = vpow.pop %v282
      %v284 = vmul.f32 %v281, 1.442695
      %v285 = vpow.pop %v284
      %v286 = vadd.f32 %v283, 1.0
      %v287 = vadd.f32 %v285, 1.0
      %v288 = vrcp.pop %v286
      %v289 = vmul.f32 1.0, %v288
      %v290 = vrcp.pop %v287
      %v291 = vmul.f32 1.0, %v290
      %v292 = vmul.f32 %v206, %v289
      %v293 = vmul.f32 %v207, %v289
      %v294 = vmul.f32 %v208, %v291
      %v295 = vmul.f32 %v209, %v291
      %v296 = vadd.f32 %v292, %v294
      %v297 = vrot.slane %v296, 4
      %v298 = vadd.f32 %v296, %v297
      %v299 = vrot.slane %v298, 2
      %v300 = vadd.f32 %v298, %v299
      %v301 = vrot.slane %v300, 1
      %v302 = vadd.f32 %v300, %v301
      %v303 = vadd.f32 %v293, %v295
      %v304 = vrot.slane %v303, 4
      %v305 = vadd.f32 %v303, %v304
      %v306 = vrot.slane %v305, 2
      %v307 = vadd.f32 %v305, %v306
      %v308 = vrot.slane %v307, 1
      %v309 = vadd.f32 %v307, %v308
      %v310 = vrcp.pop 16.0
      %v311 = vmul.f32 %v302, %v310
      %v312 = vmul.f32 %v309, %v310
      %v315 = vcombine.low %v311, %v312
      %v317 = vunpack.c.l.s4 1966171168
      %v318 = vunpack.c.0.s8 %v317
      %v319 = vlaneseq
      %v320 = vshrl.u32 %v319, 7
      %v321 = vsub.s32 %v318, %v320
      %v322 = vrot.slane %v315, %v321
      %v324 = vunpack.c.l.s4 1966171168
      %v325 = vunpack.c.0.s8 %v324
      %v326 = vlaneseq
      %v327 = vshrl.u32 %v326, 7
      %v328 = vsub.s32 %v325, %v327
      %v329 = vrot.slane %v322, %v328
      %v331 = vlaneseq
      %vm332 = vcmp.ge.s32.totalorder %v331, 0
      %vm333 = vcmp.lt.s32.totalorder %v331, 256
      %vm334 = vmand %vm332, %vm333
      %s335 = scalar_lea.vmem [#allocation2], 20
      %336 = vst.msk [vmem:[%s335] ss:$8 sm:$0x3] %vm334, %v329
      %337 = vst.msk [vmem:[%s335] ss:$8 sm:$0x0] %vm334, %v329
      %v338 = vmax.f32 %v292, %v294
      %v339 = vrot.slane %v338, 4
      %v340 = vmax.f32 %v338, %v339
      %v341 = vrot.slane %v340, 2
      %v342 = vmax.f32 %v340, %v341
      %v343 = vrot.slane %v342, 1
      %v344 = vmax.f32 %v342, %v343
      %v345 = vmax.f32 %v293, %v295
      %v346 = vrot.slane %v345, 4
      %v347 = vmax.f32 %v345, %v346
      %v348 = vrot.slane %v347, 2
      %v349 = vmax.f32 %v347, %v348
      %v350 = vrot.slane %v349, 1
      %v351 = vmax.f32 %v349, %v350
      %v354 = vcombine.low %v344, %v351
      %v356 = vunpack.c.l.s4 1966171168
      %v357 = vunpack.c.0.s8 %v356
      %v358 = vlaneseq
      %v359 = vshrl.u32 %v358, 7
      %v360 = vsub.s32 %v357, %v359
      %v361 = vrot.slane %v354, %v360
      %v363 = vunpack.c.l.s4 1966171168
      %v364 = vunpack.c.0.s8 %v363
      %v365 = vlaneseq
      %v366 = vshrl.u32 %v365, 7
      %v367 = vsub.s32 %v364, %v366
      %v368 = vrot.slane %v361, %v367
      %s370 = scalar_lea.vmem [#allocation2], 22
      %371 = vst.msk [vmem:[%s370] ss:$8 sm:$0x3] %vm334, %v368
      %372 = vst.msk [vmem:[%s370] ss:$8 sm:$0x0] %vm334, %v368
      %v373 = vmul.f32 %v242, %v228
      %v374 = vmul.f32 %v243, %v229
      %v375 = vsel %vm248, %v373, 0.0
      %v376 = vsel %vm248, %v374, 0.0
      %v377 = vadd.f32 %v375, %v376
      %v378 = vrot.slane %v377, 4
      %v379 = vadd.f32 %v377, %v378
      %v380 = vrot.slane %v379, 2
      %v381 = vadd.f32 %v379, %v380
      %v382 = vrot.slane %v381, 1
      %v383 = vadd.f32 %v381, %v382
      %v384 = vmax.f32 %v383, 0.0
      %v385 = vmul.f32 %v242, %v238
      %v386 = vmul.f32 %v243, %v241
      %v387 = vsel %vm248, %v385, 0.0
      %v388 = vsel %vm248, %v386, 0.0
      %v389 = vadd.f32 %v387, %v388
      %v390 = vrot.slane %v389, 4
      %v391 = vadd.f32 %v389, %v390
      %v392 = vrot.slane %v391, 2
      %v393 = vadd.f32 %v391, %v392
      %v394 = vrot.slane %v393, 1
      %v395 = vadd.f32 %v393, %v394
      %v396 = vmax.f32 %v395, 0.0
      %v397 = vadd.f32 %v384, %v396
      %v398 = vmul.f32 %v244, %v397
      %v399 = vmul.f32 %v245, %v397
      %v400 = vsel %vm248, %v398, 0.0
      %401 = vadd.xlane.f32.xlu0 %v400
      %v402 = vpop.xlane.xlu0 %401
      %v403 = vsel %vm248, %v399, 0.0
      %404 = vadd.xlane.f32.xlu0 %v403
      %v405 = vpop.xlane.xlu0 %404
      %v406 = vxor.u32 %v402, 2147483648
      %v407 = vxor.u32 %v405, 2147483648
      %v408 = vmul.f32 %v406, 1.442695
      %v409 = vpow.pop %v408
      %v410 = vmul.f32 %v407, 1.442695
      %v411 = vpow.pop %v410
      %v412 = vadd.f32 %v409, 1.0
      %v413 = vadd.f32 %v411, 1.0
      %v414 = vrcp.pop %v412
      %v415 = vmul.f32 1.0, %v414
      %v416 = vrcp.pop %v413
      %v417 = vmul.f32 1.0, %v416
      %v418 = vmul.f32 %v210, %v415
      %v419 = vmul.f32 %v211, %v415
      %v420 = vmul.f32 %v212, %v417
      %v421 = vmul.f32 %v213, %v417
      %v422 = vadd.f32 %v418, %v420
      %v423 = vrot.slane %v422, 4
      %v424 = vadd.f32 %v422, %v423
      %v425 = vrot.slane %v424, 2
      %v426 = vadd.f32 %v424, %v425
      %v427 = vrot.slane %v426, 1
      %v428 = vadd.f32 %v426, %v427
      %v429 = vadd.f32 %v419, %v421
      %v430 = vrot.slane %v429, 4
      %v431 = vadd.f32 %v429, %v430
      %v432 = vrot.slane %v431, 2
      %v433 = vadd.f32 %v431, %v432
      %v434 = vrot.slane %v433, 1
      %v435 = vadd.f32 %v433, %v434
      %v436 = vmul.f32 %v428, %v310
      %v437 = vmul.f32 %v435, %v310
      %v440 = vcombine.low %v436, %v437
      %v442 = vunpack.c.l.s4 1966171168
      %v443 = vunpack.c.0.s8 %v442
      %v444 = vlaneseq
      %v445 = vshrl.u32 %v444, 7
      %v446 = vsub.s32 %v443, %v445
      %v447 = vrot.slane %v440, %v446
      %v449 = vunpack.c.l.s4 1966171168
      %v450 = vunpack.c.0.s8 %v449
      %v451 = vlaneseq
      %v452 = vshrl.u32 %v451, 7
      %v453 = vsub.s32 %v450, %v452
      %v454 = vrot.slane %v447, %v453
      %s456 = scalar_lea.vmem [#allocation2], 21
      %457 = vst.msk [vmem:[%s456] ss:$8 sm:$0x3] %vm334, %v454
      %458 = vst.msk [vmem:[%s456] ss:$8 sm:$0x0] %vm334, %v454
      %v459 = vmax.f32 %v418, %v420
      %v460 = vrot.slane %v459, 4
      %v461 = vmax.f32 %v459, %v460
      %v462 = vrot.slane %v461, 2
      %v463 = vmax.f32 %v461, %v462
      %v464 = vrot.slane %v463, 1
      %v465 = vmax.f32 %v463, %v464
      %v466 = vmax.f32 %v419, %v421
      %v467 = vrot.slane %v466, 4
      %v468 = vmax.f32 %v466, %v467
      %v469 = vrot.slane %v468, 2
      %v470 = vmax.f32 %v468, %v469
      %v471 = vrot.slane %v470, 1
      %v472 = vmax.f32 %v470, %v471
      %v475 = vcombine.low %v465, %v472
      %v477 = vunpack.c.l.s4 1966171168
      %v478 = vunpack.c.0.s8 %v477
      %v479 = vlaneseq
      %v480 = vshrl.u32 %v479, 7
      %v481 = vsub.s32 %v478, %v480
      %v482 = vrot.slane %v475, %v481
      %v484 = vunpack.c.l.s4 1966171168
      %v485 = vunpack.c.0.s8 %v484
      %v486 = vlaneseq
      %v487 = vshrl.u32 %v486, 7
      %v488 = vsub.s32 %v485, %v487
      %v489 = vrot.slane %v482, %v488
      %s491 = scalar_lea.vmem [#allocation2], 23
      %492 = vst.msk [vmem:[%s491] ss:$8 sm:$0x3] %vm334, %v489
      %493 = vst.msk [vmem:[%s491] ss:$8 sm:$0x0] %vm334, %v489
      %v494 = vlaneseq
      %v495 = vand.u32 %v494, 127
      %v496 = vadd.s32 %v495, 128
      %vm497 = vcmp.lt.s32.totalorder %v495, 0
      %v498 = vsub.s32 0, %v495
      %v499 = vsel %vm497, %v498, %v495
      %v500 = vshrl.u32 %v499, 4
      %v501 = vand.u32 %v499, 15
      %v502 = vsub.s32 0, %v501
      %v503 = vsel %vm497, %v502, %v501
      %vm504 = vcmp.lt.s32.totalorder %v496, 0
      %v505 = vsub.s32 0, %v496
      %v506 = vsel %vm504, %v505, %v496
      %v507 = vshrl.u32 %v506, 4
      %v508 = vand.u32 %v506, 15
      %v509 = vsub.s32 0, %v508
      %v510 = vsel %vm504, %v509, %v508
      %vm511 = vcmp.ne.s32.totalorder %v503, 0
      %vm512 = vcmp.ne.s32.totalorder %v510, 0
      %vm513 = vcmp.lt.s32.totalorder %v503, 0
      %vm514 = vcmp.lt.s32.totalorder %v510, 0
      %vm515 = vmand %vm513, %vm511
      %vm516 = vmand %vm514, %vm512
      %v517 = vadd.s32 %v503, 16
      %v518 = vadd.s32 %v510, 16
      %v519 = vsel %vm515, %v517, %v503
      %v520 = vsel %vm516, %v518, %v510
      %v521 = vld [vmem:[#allocation2 + $0x10] sm:$0xf0]
      %v522 = vld [vmem:[#allocation2 + $0x18] sm:$0xf0]
      %v525 = vrot.slane %v521, 4
      %v526 = vrot.slane %v522, 4
      %529 = vrot.lane.b32.xlu0 %v525, 3
      %v530 = vpop.permute.xlu0 %529
      %531 = vrot.lane.b32.xlu0 %v526, 3
      %v532 = vpop.permute.xlu0 %531
      %vm533 = vcmp.lt.s32.totalorder %v495, 3
      %v534 = vsel %vm533, %v530, %v532
      %v535 = vsel %vm533, %v532, %v530
      %v536 = vadd.s32 %v519, 4294967293
      %v537 = vadd.s32 %v520, 4294967293
      %vm538 = vcmp.ge.s32.totalorder %v536, 0
      %vm539 = vcmp.ge.s32.totalorder %v537, 0
      %vm540 = vcmp.lt.s32.totalorder %v536, 16
      %vm541 = vcmp.lt.s32.totalorder %v537, 16
      %vm542 = vmand %vm538, %vm540
      %vm543 = vmand %vm539, %vm541
      %v544 = vsel %vm542, 1.0, 0.0
      %v545 = vsel %vm543, 1.0, 0.0
      %v546 = vmul.f32 %v535, %v544
      %v547 = vmul.f32 %v534, %v545
      %548 = vst [vmem:[#allocation2] sm:$0xf] %v546
      %549 = vst [vmem:[#allocation2 + $0x8] sm:$0xf] %v547
      %550 = vrot.lane.b32.xlu0 %v525, 2
      %v551 = vpop.permute.xlu0 %550
      %552 = vrot.lane.b32.xlu0 %v526, 2
      %v553 = vpop.permute.xlu0 %552
      %vm554 = vcmp.lt.s32.totalorder %v495, 2
      %v555 = vsel %vm554, %v551, %v553
      %v556 = vsel %vm554, %v553, %v551
      %v557 = vadd.s32 %v519, 4294967294
      %v558 = vadd.s32 %v520, 4294967294
      %vm559 = vcmp.ge.s32.totalorder %v557, 0
      %vm560 = vcmp.ge.s32.totalorder %v558, 0
      %vm561 = vcmp.lt.s32.totalorder %v557, 16
      %vm562 = vcmp.lt.s32.totalorder %v558, 16
      %vm563 = vmand %vm559, %vm561
      %vm564 = vmand %vm560, %vm562
      %v565 = vsel %vm563, 1.0, 0.0
      %v566 = vsel %vm564, 1.0, 0.0
      %v567 = vmul.f32 %v556, %v565
      %v568 = vmul.f32 %v555, %v566
      %v571 = vrot.slane %v567, 4
      %v572 = vrot.slane %v568, 4
      %575 = vst [vmem:[#allocation2] sm:$0xf0] %v571
      %576 = vst [vmem:[#allocation2 + $0x8] sm:$0xf0] %v572
      %577 = vrot.lane.b32.xlu0 %v525, 1
      %v578 = vpop.permute.xlu0 %577
      %579 = vrot.lane.b32.xlu0 %v526, 1
      %v580 = vpop.permute.xlu0 %579
      %vm581 = vcmp.lt.s32.totalorder %v495, 1
      %v582 = vsel %vm581, %v578, %v580
      %v583 = vsel %vm581, %v580, %v578
      %v584 = vadd.s32 %v519, 4294967295
      %v585 = vadd.s32 %v520, 4294967295
      %vm586 = vcmp.ge.s32.totalorder %v584, 0
      %vm587 = vcmp.ge.s32.totalorder %v585, 0
      %vm588 = vcmp.lt.s32.totalorder %v584, 16
      %vm589 = vcmp.lt.s32.totalorder %v585, 16
      %vm590 = vmand %vm586, %vm588
      %vm591 = vmand %vm587, %vm589
      %v592 = vsel %vm590, 1.0, 0.0
      %v593 = vsel %vm591, 1.0, 0.0
      %v594 = vmul.f32 %v583, %v592
      %v595 = vmul.f32 %v582, %v593
      %596 = vst [vmem:[#allocation2 + $0x10] sm:$0xf] %v594
      %597 = vst [vmem:[#allocation2 + $0x18] sm:$0xf] %v595
      %598 = vrot.lane.b32.xlu0 %v525, 127
      %v599 = vpop.permute.xlu0 %598
      %600 = vrot.lane.b32.xlu0 %v526, 127
      %v601 = vpop.permute.xlu0 %600
      %vm602 = vcmp.lt.s32.totalorder %v495, 127
      %v603 = vsel %vm602, %v599, %v601
      %v604 = vsel %vm602, %v601, %v599
      %v605 = vadd.s32 %v519, 1
      %v606 = vadd.s32 %v520, 1
      %vm607 = vcmp.ge.s32.totalorder %v605, 0
      %vm608 = vcmp.ge.s32.totalorder %v606, 0
      %vm609 = vcmp.lt.s32.totalorder %v605, 16
      %vm610 = vcmp.lt.s32.totalorder %v606, 16
      %vm611 = vmand %vm607, %vm609
      %vm612 = vmand %vm608, %vm610
      %v613 = vsel %vm611, 1.0, 0.0
      %v614 = vsel %vm612, 1.0, 0.0
      %v615 = vmul.f32 %v603, %v613
      %v616 = vmul.f32 %v604, %v614
      %617 = vst [vmem:[#allocation2 + $0x20] sm:$0xf] %v615
      %618 = vst [vmem:[#allocation2 + $0x28] sm:$0xf] %v616
      %619 = vrot.lane.b32.xlu0 %v525, 126
      %v620 = vpop.permute.xlu0 %619
      %621 = vrot.lane.b32.xlu0 %v526, 126
      %v622 = vpop.permute.xlu0 %621
      %vm623 = vcmp.lt.s32.totalorder %v495, 126
      %v624 = vsel %vm623, %v620, %v622
      %v625 = vsel %vm623, %v622, %v620
      %v626 = vadd.s32 %v519, 2
      %v627 = vadd.s32 %v520, 2
      %vm628 = vcmp.ge.s32.totalorder %v626, 0
      %vm629 = vcmp.ge.s32.totalorder %v627, 0
      %vm630 = vcmp.lt.s32.totalorder %v626, 16
      %vm631 = vcmp.lt.s32.totalorder %v627, 16
      %vm632 = vmand %vm628, %vm630
      %vm633 = vmand %vm629, %vm631
      %v634 = vsel %vm632, 1.0, 0.0
      %v635 = vsel %vm633, 1.0, 0.0
      %v636 = vmul.f32 %v624, %v634
      %v637 = vmul.f32 %v625, %v635
      %v640 = vrot.slane %v636, 4
      %v641 = vrot.slane %v637, 4
      %644 = vst [vmem:[#allocation2 + $0x20] sm:$0xf0] %v640
      %645 = vst [vmem:[#allocation2 + $0x28] sm:$0xf0] %v641
      %646 = vrot.lane.b32.xlu0 %v525, 125
      %v647 = vpop.permute.xlu0 %646
      %648 = vrot.lane.b32.xlu0 %v526, 125
      %v649 = vpop.permute.xlu0 %648
      %vm650 = vcmp.lt.s32.totalorder %v495, 125
      %v651 = vsel %vm650, %v647, %v649
      %v652 = vsel %vm650, %v649, %v647
      %v653 = vadd.s32 %v519, 3
      %v654 = vadd.s32 %v520, 3
      %vm655 = vcmp.ge.s32.totalorder %v653, 0
      %vm656 = vcmp.ge.s32.totalorder %v654, 0
      %vm657 = vcmp.lt.s32.totalorder %v653, 16
      %vm658 = vcmp.lt.s32.totalorder %v654, 16
      %vm659 = vmand %vm655, %vm657
      %vm660 = vmand %vm656, %vm658
      %v661 = vsel %vm659, 1.0, 0.0
      %v662 = vsel %vm660, 1.0, 0.0
      %v663 = vmul.f32 %v651, %v661
      %v664 = vmul.f32 %v652, %v662
      %665 = vst [vmem:[#allocation2 + $0x30] sm:$0xf] %v663
      %666 = vst [vmem:[#allocation2 + $0x38] sm:$0xf] %v664
      %667 = vst [vmem:[#allocation2 + $0x30] sm:$0xf0] 0.0
      %668 = vst [vmem:[#allocation2 + $0x38] sm:$0xf0] 0.0
      %v669 = vld [vmem:[%s3] sm:$0xff]
      %v670 = vld [vmem:[%s3 + $0x8] sm:$0xff]
      %v671 = vld [vmem:[#allocation2] sm:$0xff]
      %v672 = vld [vmem:[#allocation2 + $0x8] sm:$0xff]
      %v673 = vld [vmem:[#allocation2 + $0x10] sm:$0xff]
      %v674 = vld [vmem:[#allocation2 + $0x18] sm:$0xff]
      %v675 = vld [vmem:[#allocation2 + $0x20] sm:$0xff]
      %v676 = vld [vmem:[#allocation2 + $0x28] sm:$0xff]
      %v677 = vld [vmem:[#allocation2 + $0x30] sm:$0xff]
      %v678 = vld [vmem:[#allocation2 + $0x38] sm:$0xff]
      %vm679 = vcmask 261120
      %v681 = vsel %vm679, %v669, 0
      %v684 = vsel %vm679, %v670, 0
      %686 = vmatprep.subr.mxu0 %v672
      %687 = vmatpush1.msra.mxu0 %v671
      %688 = vmatprep.subr.mxu0 %v674
      %689 = vmatpush1.msra.mxu0 %v673
      %690 = vmatprep.subr.mxu0 %v676
      %691 = vmatpush1.msra.mxu0 %v675
      %692 = vmatprep.subr.mxu0 %v678
      %693 = vmatpush1.msra.mxu0 %v677
      %694 = vmatprep.subr.mxu0 0.0
      %695 = vmatpush1.msra.mxu0 0.0
      %696 = vmatprep.subr.mxu0 0.0
      %697 = vmatpush1.msra.mxu0 0.0
      %698 = vmatprep.subr.mxu0 0.0
      %699 = vmatpush1.msra.mxu0 0.0
      %700 = vmatprep.subr.mxu0 0.0
      %701 = vmatpush1.msra.mxu0 0.0
      %702 = vmatprep.subr.mxu0 0.0
      %703 = vmatpush1.msra.mxu0 0.0
      %704 = vmatprep.subr.mxu0 0.0
      %705 = vmatpush1.msra.mxu0 0.0
      %706 = vmatprep.subr.mxu0 0.0
      %707 = vmatpush1.msra.mxu0 0.0
      %708 = vmatprep.subr.mxu0 0.0
      %709 = vmatpush1.msra.mxu0 0.0
      %710 = vmatprep.subr.mxu0 0.0
      %711 = vmatpush1.msra.mxu0 0.0
      %712 = vmatprep.subr.mxu0 0.0
      %713 = vmatpush1.msra.mxu0 0.0
      %714 = vmatprep.subr.mxu0 0.0
      %715 = vmatpush1.msra.mxu0 0.0
      %716 = vmatprep.subr.mxu0 0.0
      %717 = vmatpush1.msra.mxu0 0.0
      %718 = vmatprep.subr.mxu0 0.0
      %719 = vmatpush1.msra.mxu0 0.0
      %720 = vmatprep.subr.mxu0 0.0
      %721 = vmatpush1.msra.mxu0 0.0
      %722 = vmatprep.subr.mxu0 0.0
      %723 = vmatpush1.msra.mxu0 0.0
      %724 = vmatprep.subr.mxu0 0.0
      %725 = vmatpush1.msra.mxu0 0.0
      %726 = vmatprep.subr.mxu0 0.0
      %727 = vmatpush1.msra.mxu0 0.0
      %728 = vmatprep.subr.mxu0 0.0
      %729 = vmatpush1.msra.mxu0 0.0
      %730 = vmatprep.subr.mxu0 0.0
      %731 = vmatpush1.msra.mxu0 0.0
      %732 = vmatprep.subr.mxu0 0.0
      %733 = vmatpush1.msra.mxu0 0.0
      %734 = vmatprep.subr.mxu0 0.0
      %735 = vmatpush1.msra.mxu0 0.0
      %736 = vmatprep.subr.mxu0 0.0
      %737 = vmatpush1.msra.mxu0 0.0
      %738 = vmatprep.subr.mxu0 0.0
      %739 = vmatpush1.msra.mxu0 0.0
      %740 = vmatprep.subr.mxu0 0.0
      %741 = vmatpush1.msra.mxu0 0.0
      %742 = vmatprep.subr.mxu0 0.0
      %743 = vmatpush1.msra.mxu0 0.0
      %744 = vmatprep.subr.mxu0 0.0
      %745 = vmatpush1.msra.mxu0 0.0
      %746 = vmatprep.subr.mxu0 0.0
      %747 = vmatpush1.msra.mxu0 0.0
      %748 = vmatprep.subr.mxu0 0.0
      %749 = vmatpush1.msra.mxu0 0.0
      %750 = vmatprep.mubr.f32.mxu0 0.0
      %751 = vmatmul.mubr.f32.gmra.mrb[0].mxu0 %v681
      %v752 = vpop.f32.mrb[0].mxu0
      %v753 = vadd.f32 0.0, %v752
      %v754 = vpop.f32.mrb[0].mxu0
      %v755 = vadd.f32 0.0, %v754
      %756 = vmatprep.mubr.f32.mxu0 0.0
      %757 = vmatmul.mubr.f32.gmra.mrb[0].mxu0 %v684
      %v758 = vpop.f32.mrb[0].mxu0
      %v759 = vadd.f32 0.0, %v758
      %v760 = vpop.f32.mrb[0].mxu0
      %v761 = vadd.f32 0.0, %v760
      %762 = vdwg.mxu0
      %763 = vrot.lane.b32.xlu0 %v753, 48
      %v764 = vpop.permute.xlu0 %763
      %765 = vrot.lane.b32.xlu0 %v755, 48
      %v766 = vpop.permute.xlu0 %765
      %vm767 = vcmp.lt.s32.totalorder %v495, 48
      %v768 = vsel %vm767, %v764, %v766
      %v769 = vsel %vm767, %v766, %v764
      %v770 = vadd.s32 %v495, 4294967248
      %v771 = vadd.s32 %v496, 4294967248
      %vm772 = vcmp.ge.s32.totalorder %v770, 0
      %vm773 = vcmp.ge.s32.totalorder %v771, 0
      %vm774 = vcmp.lt.s32.totalorder %v770, 256
      %vm775 = vcmp.lt.s32.totalorder %v771, 256
      %vm776 = vmand %vm772, %vm774
      %vm777 = vmand %vm773, %vm775
      %v778 = vsel %vm776, 1.0, 0.0
      %v779 = vsel %vm777, 1.0, 0.0
      %v780 = vmul.f32 %v769, %v778
      %v781 = vmul.f32 %v768, %v779
      %v784 = vrot.slane %v780, 2
      %v785 = vrot.slane %v781, 2
      %v788 = vadd.f32 %v753, %v784
      %v789 = vadd.f32 %v755, %v785
      %v792 = vrot.slane %v753, 2
      %v793 = vrot.slane %v755, 2
      %796 = vrot.lane.b32.xlu0 %v792, 32
      %v797 = vpop.permute.xlu0 %796
      %798 = vrot.lane.b32.xlu0 %v793, 32
      %v799 = vpop.permute.xlu0 %798
      %vm800 = vcmp.lt.s32.totalorder %v495, 32
      %v801 = vsel %vm800, %v797, %v799
      %v802 = vsel %vm800, %v799, %v797
      %v803 = vadd.s32 %v495, 4294967264
      %v804 = vadd.s32 %v496, 4294967264
      %vm805 = vcmp.ge.s32.totalorder %v803, 0
      %vm806 = vcmp.ge.s32.totalorder %v804, 0
      %vm807 = vcmp.lt.s32.totalorder %v803, 256
      %vm808 = vcmp.lt.s32.totalorder %v804, 256
      %vm809 = vmand %vm805, %vm807
      %vm810 = vmand %vm806, %vm808
      %v811 = vsel %vm809, 1.0, 0.0
      %v812 = vsel %vm810, 1.0, 0.0
      %v813 = vmul.f32 %v802, %v811
      %v814 = vmul.f32 %v801, %v812
      %v817 = vrot.slane %v813, 2
      %v818 = vrot.slane %v814, 2
      %v821 = vadd.f32 %v788, %v817
      %v822 = vadd.f32 %v789, %v818
      %v823 = vrot.slane %v753, 4
      %v824 = vrot.slane %v755, 4
      %827 = vrot.lane.b32.xlu0 %v823, 16
      %v828 = vpop.permute.xlu0 %827
      %829 = vrot.lane.b32.xlu0 %v824, 16
      %v830 = vpop.permute.xlu0 %829
      %vm831 = vcmp.lt.s32.totalorder %v495, 16
      %v832 = vsel %vm831, %v828, %v830
      %v833 = vsel %vm831, %v830, %v828
      %v834 = vadd.s32 %v495, 4294967280
      %v835 = vadd.s32 %v496, 4294967280
      %vm836 = vcmp.ge.s32.totalorder %v834, 0
      %vm837 = vcmp.ge.s32.totalorder %v835, 0
      %vm838 = vcmp.lt.s32.totalorder %v834, 256
      %vm839 = vcmp.lt.s32.totalorder %v835, 256
      %vm840 = vmand %vm836, %vm838
      %vm841 = vmand %vm837, %vm839
      %v842 = vsel %vm840, 1.0, 0.0
      %v843 = vsel %vm841, 1.0, 0.0
      %v844 = vmul.f32 %v833, %v842
      %v845 = vmul.f32 %v832, %v843
      %v848 = vrot.slane %v844, 2
      %v849 = vrot.slane %v845, 2
      %v852 = vadd.f32 %v821, %v848
      %v853 = vadd.f32 %v822, %v849
      %854 = vrot.lane.b32.xlu0 %v759, 112
      %v855 = vpop.permute.xlu0 %854
      %856 = vrot.lane.b32.xlu0 %v761, 112
      %v857 = vpop.permute.xlu0 %856
      %vm858 = vcmp.lt.s32.totalorder %v495, 112
      %v859 = vsel %vm858, %v855, %v857
      %v860 = vsel %vm858, %v857, %v855
      %v861 = vadd.s32 %v495, 16
      %v862 = vadd.s32 %v496, 16
      %vm863 = vcmp.ge.s32.totalorder %v861, 0
      %vm864 = vcmp.ge.s32.totalorder %v862, 0
      %vm865 = vcmp.lt.s32.totalorder %v861, 256
      %vm866 = vcmp.lt.s32.totalorder %v862, 256
      %vm867 = vmand %vm863, %vm865
      %vm868 = vmand %vm864, %vm866
      %v869 = vsel %vm867, 1.0, 0.0
      %v870 = vsel %vm868, 1.0, 0.0
      %v871 = vmul.f32 %v859, %v869
      %v872 = vmul.f32 %v860, %v870
      %v875 = vrot.slane %v871, 2
      %v876 = vrot.slane %v872, 2
      %v879 = vadd.f32 %v852, %v875
      %v880 = vadd.f32 %v853, %v876
      %v883 = vrot.slane %v759, 2
      %v884 = vrot.slane %v761, 2
      %887 = vrot.lane.b32.xlu0 %v883, 96
      %v888 = vpop.permute.xlu0 %887
      %889 = vrot.lane.b32.xlu0 %v884, 96
      %v890 = vpop.permute.xlu0 %889
      %vm891 = vcmp.lt.s32.totalorder %v495, 96
      %v892 = vsel %vm891, %v888, %v890
      %v893 = vsel %vm891, %v890, %v888
      %v894 = vadd.s32 %v495, 32
      %v895 = vadd.s32 %v496, 32
      %vm896 = vcmp.ge.s32.totalorder %v894, 0
      %vm897 = vcmp.ge.s32.totalorder %v895, 0
      %vm898 = vcmp.lt.s32.totalorder %v894, 256
      %vm899 = vcmp.lt.s32.totalorder %v895, 256
      %vm900 = vmand %vm896, %vm898
      %vm901 = vmand %vm897, %vm899
      %v902 = vsel %vm900, 1.0, 0.0
      %v903 = vsel %vm901, 1.0, 0.0
      %v904 = vmul.f32 %v892, %v902
      %v905 = vmul.f32 %v893, %v903
      %v908 = vrot.slane %v904, 2
      %v909 = vrot.slane %v905, 2
      %v912 = vadd.f32 %v879, %v908
      %v913 = vadd.f32 %v880, %v909
      %v914 = vrot.slane %v759, 4
      %v915 = vrot.slane %v761, 4
      %918 = vrot.lane.b32.xlu0 %v914, 80
      %v919 = vpop.permute.xlu0 %918
      %920 = vrot.lane.b32.xlu0 %v915, 80
      %v921 = vpop.permute.xlu0 %920
      %vm922 = vcmp.lt.s32.totalorder %v495, 80
      %v923 = vsel %vm922, %v919, %v921
      %v924 = vsel %vm922, %v921, %v919
      %v925 = vadd.s32 %v495, 48
      %v926 = vadd.s32 %v496, 48
      %vm927 = vcmp.ge.s32.totalorder %v925, 0
      %vm928 = vcmp.ge.s32.totalorder %v926, 0
      %vm929 = vcmp.lt.s32.totalorder %v925, 256
      %vm930 = vcmp.lt.s32.totalorder %v926, 256
      %vm931 = vmand %vm927, %vm929
      %vm932 = vmand %vm928, %vm930
      %v933 = vsel %vm931, 1.0, 0.0
      %v934 = vsel %vm932, 1.0, 0.0
      %v935 = vmul.f32 %v923, %v933
      %v936 = vmul.f32 %v924, %v934
      %v939 = vrot.slane %v935, 2
      %v940 = vrot.slane %v936, 2
      %v943 = vadd.f32 %v912, %v939
      %v944 = vadd.f32 %v913, %v940
      %v945 = vxor.u32 %v943, 2147483648
      %v946 = vxor.u32 %v944, 2147483648
      %v947 = vmul.f32 %v945, 1.442695
      %v948 = vpow.pop %v947
      %v949 = vmul.f32 %v946, 1.442695
      %v950 = vpow.pop %v949
      %v951 = vadd.f32 %v948, 1.0
      %v952 = vadd.f32 %v950, 1.0
      %v953 = vrcp.pop %v951
      %v954 = vmul.f32 1.0, %v953
      %v955 = vrcp.pop %v952
      %v956 = vmul.f32 1.0, %v955
      %v957 = vlaneseq
      %v958 = vshrl.u32 %v957, 7
      %v959 = vsub.s32 6, %v958
      %v960 = vrot.slane %v954, %v959
      %v961 = vlaneseq
      %v962 = vshrl.u32 %v961, 7
      %v963 = vsub.s32 6, %v962
      %v964 = vrot.slane %v956, %v963
      %v965 = vmul.f32 %v292, %v960
      %v966 = vmul.f32 %v293, %v964
      %v967 = vmul.f32 %v294, %v960
      %v968 = vmul.f32 %v295, %v964
      %969 = vst [vmem:[%s204] sm:$0xff] %v965
      %970 = vst [vmem:[%s204 + $0x8] sm:$0xff] %v966
      %971 = vst [vmem:[%s204 + $0x10] sm:$0xff] %v967
      %972 = vst [vmem:[%s204 + $0x18] sm:$0xff] %v968
      %v973 = vlaneseq
      %v974 = vshrl.u32 %v973, 7
      %v975 = vsub.s32 7, %v974
      %v976 = vrot.slane %v954, %v975
      %v977 = vlaneseq
      %v978 = vshrl.u32 %v977, 7
      %v979 = vsub.s32 7, %v978
      %v980 = vrot.slane %v956, %v979
      %v981 = vmul.f32 %v418, %v976
      %v982 = vmul.f32 %v419, %v980
      %v983 = vmul.f32 %v420, %v976
      %v984 = vmul.f32 %v421, %v980
      %985 = vst [vmem:[%s204 + $0x20] sm:$0xff] %v981
      %986 = vst [vmem:[%s204 + $0x28] sm:$0xff] %v982
      %987 = vst [vmem:[%s204 + $0x30] sm:$0xff] %v983
      %988 = vst [vmem:[%s204 + $0x38] sm:$0xff] %v984
      %s989 = smul.u32 4, %s15
      %p990 = scmp.lt.s32.totalorder %s989, 7
      %s991 = scalar_select %p990, %s989, 7
      %s992 = smul.addr %s991, 2
      %s993 = smul.addr %s992, 8
      %s994 = scalar_lea.vmem %s4, %s993
      // Predicated region
      $region37: #{cbam_block.1} parent=35 // pred_check
        %p995 = pneg %p122
      $region38: #{cbam_block.1} parent=35 // pred_check_branch
        %997 = sbr.rel (%p995) target = $region40
      $region39: #{cbam_block.1} parent=35 // pred_region
        %s998 = smul.u32 4, %s15
      $region40: #{cbam_block.1} parent=35 // pred_fallthru
        _
    $region36: #{cbam_block.1} parent=5 // pred_fallthru
      _
    %p999 = scmp.le.s32.totalorder 2, %s10
    // Predicated region
    $region41: #{cbam_block.1} parent=5 // pred_check
      %p1000 = pneg %p999
    $region42: #{cbam_block.1} parent=5 // pred_check_branch
      %1002 = sbr.rel (%p1000) target = $region44
    $region43: #{cbam_block.1} parent=5 // pred_region
      %s1003 = ssub.s32 %s10, 2
      // Predicated region
      $region45: #{cbam_block.1} parent=43 // pred_check
        %p1004 = pneg %p128
      $region46: #{cbam_block.1} parent=43 // pred_check_branch
        %1006 = sbr.rel (%p1004) target = $region48
      $region47: #{cbam_block.1} parent=43 // pred_region
        %s1007 = smul.u32 4, %s16
        %p1008 = scmp.lt.s32.totalorder %s1007, 7
        %s1009 = scalar_select %p1008, %s1007, 7
        %s1010 = smul.addr %s1009, 2
        %s1011 = smul.addr %s1010, 8
        %s1012 = scalar_lea.vmem %s4, %s1011
      $region48: #{cbam_block.1} parent=43 // pred_fallthru
        _
    $region44: #{cbam_block.1} parent=5 // pred_fallthru
      _
  $region6: #{cbam_block.1} parent=0 // loop_footer
    %s14 = sadd.s32 1, %s10
  $region7: #{cbam_block.1} parent=0 // loop_footer_branch
    %9 = sbr.rel target = $region3
  $region8: #{cbam_block.1} parent=0 // loop_exit
    _

</llo_original>
